<compile_context>
chip_gen: v5e
topology: v5e:2x2
jax: 0.10.0
libtpu: 0.0.40
codegen_flags: <defaults>
</compile_context>

<pallas_src>
import jax
import jax.numpy as jnp
import numpy as np
from jax import lax
from jax.experimental import pallas as pl
from jax.experimental.pallas import tpu as pltpu


# ---------------------------------------------------------------------------
# Fused Pallas kernel (all LSTM layers + FC head), wavefronted time loop.
# ---------------------------------------------------------------------------
def make_fused_lstm_kernel(num_layers, T, B, H):
    """Ref order: x_flat, (w_ih_t, w_hh_t, b) * num_layers, fc_w_t, fc_b, out."""

    def kernel(*refs):
        x_ref = refs[0]
        layer_refs = [tuple(refs[1 + 3 * l: 4 + 3 * l]) for l in range(num_layers)]
        fc_w_ref = refs[1 + 3 * num_layers]
        fc_b_ref = refs[2 + 3 * num_layers]
        o_ref = refs[3 + 3 * num_layers]

        # --- Hoisted lane-constant masks for the single-tanh gate trick ---
        # sigmoid(x) = 0.5*tanh(0.5*x) + 0.5 on the i/f/o blocks, plain tanh on g.
        lane = lax.broadcasted_iota(jnp.int32, (B, 4 * H), 1)
        is_g = (lane >= 2 * H) & (lane < 3 * H)
        scale = jnp.where(is_g, jnp.float32(1.0), jnp.float32(0.5))   # pre & post scale
        shift = jnp.where(is_g, jnp.float32(0.0), jnp.float32(0.5))   # post shift

        # --- Load weights once (bf16), hoist bias broadcasts ---
        whh = [layer_refs[l][1][...] for l in range(num_layers)]          # (H, 4H) bf16
        wih_deep = [layer_refs[l][0][...] for l in range(1, num_layers)]  # (H, 4H) bf16
        bias_deep = [jnp.broadcast_to(layer_refs[l][2][...], (B, 4 * H))  # (B, 4H) f32
                     for l in range(1, num_layers)]

        # --- Layer-0 input projection hoisted over ALL timesteps ---
        x_bf = x_ref[...].astype(jnp.bfloat16)                            # (TB, Din)
        pre0 = jnp.dot(x_bf, layer_refs[0][0][...],
                       preferred_element_type=jnp.float32) + layer_refs[0][2][...]

        h = [jnp.zeros((B, H), jnp.float32) for _ in range(num_layers)]
        c = [jnp.zeros((B, H), jnp.float32) for _ in range(num_layers)]

        def cell(gates, c_prev):
            act = jnp.tanh(gates * scale) * scale + shift     # one EUP pass over (B,4H)
            i_g = act[:, 0 * H:1 * H]
            f_g = act[:, 1 * H:2 * H]
            g_g = act[:, 2 * H:3 * H]
            o_g = act[:, 3 * H:4 * H]
            c_new = f_g * c_prev + i_g * g_g
            h_new = o_g * jnp.tanh(c_new)
            return h_new, c_new

        # Single (fully unrolled) time loop; per step, layer l>=1 consumes the
        # hidden state of layer l-1 produced this step, so across the unrolled
        # trace layer-1 step t overlaps with layer-0 step t+1 (wavefront).
        for t in range(T):
            g0 = pre0[t * B:(t + 1) * B, :] + jnp.dot(
                h[0].astype(jnp.bfloat16), whh[0],
                preferred_element_type=jnp.float32)
            h[0], c[0] = cell(g0, c[0])
            for l in range(1, num_layers):
                gl = (jnp.dot(h[l - 1].astype(jnp.bfloat16), wih_deep[l - 1],
                              preferred_element_type=jnp.float32)
                      + bias_deep[l - 1]
                      + jnp.dot(h[l].astype(jnp.bfloat16), whh[l],
                                preferred_element_type=jnp.float32))
                h[l], c[l] = cell(gl, c[l])

        # FC head on the last timestep's hidden state (== out[:, -1]).
        o_ref[...] = (
            jnp.dot(h[-1].astype(jnp.bfloat16), fc_w_ref[...],
                    preferred_element_type=jnp.float32)
            + fc_b_ref[...]
        )

    return kernel


# ---------------------------------------------------------------------------
# One-time host-side parameter prep (outside jit): pre-transpose to lane-major
# (4H last), combine biases, pre-cast MXU operands to bf16.
# ---------------------------------------------------------------------------
def prepare_params(params):
    prepped = {"layers": []}
    for (w_ih, w_hh, b_ih, b_hh) in params["lstm"]:
        prepped["layers"].append((
            jnp.asarray(w_ih.T, jnp.bfloat16),                     # (Din, 4H)
            jnp.asarray(w_hh.T, jnp.bfloat16),                     # (H, 4H)
            jnp.asarray((b_ih + b_hh).reshape(1, -1), jnp.float32),  # (1, 4H)
        ))
    prepped["fc_w_t"] = jnp.asarray(params["fc_w"].T, jnp.bfloat16)          # (H, O)
    prepped["fc_b"] = jnp.asarray(params["fc_b"].reshape(1, -1), jnp.float32)  # (1, O)
    return prepped


# ---------------------------------------------------------------------------
# Wrapper (glue in plain JAX)
# ---------------------------------------------------------------------------
@jax.jit
def lstm_model_forward(x_btd, prepped):
    """Full forward pass. x_btd: (B, T, input_dim), batch_first like PyTorch."""
    B, T, D = x_btd.shape
    num_layers = len(prepped["layers"])
    H = prepped["layers"][0][1].shape[0]            # w_hh_t: (H, 4H)
    O = prepped["fc_w_t"].shape[1]
    TB = T * B

    # Time-major flatten so the hoisted layer-0 projection is one matmul.
    x_flat = jnp.transpose(x_btd, (1, 0, 2)).reshape(TB, D)

    inputs = [x_flat]
    in_specs = [pl.BlockSpec((TB, D), lambda i: (0, 0))]
    for (w_ih_t, w_hh_t, b) in prepped["layers"]:
        din = w_ih_t.shape[0]
        inputs += [w_ih_t, w_hh_t, b]
        in_specs += [
            pl.BlockSpec((din, 4 * H), lambda i: (0, 0)),
            pl.BlockSpec((H, 4 * H), lambda i: (0, 0)),
            pl.BlockSpec((1, 4 * H), lambda i: (0, 0)),
        ]
    inputs += [prepped["fc_w_t"], prepped["fc_b"]]
    in_specs += [
        pl.BlockSpec((H, O), lambda i: (0, 0)),
        pl.BlockSpec((1, O), lambda i: (0, 0)),
    ]

    kernel = make_fused_lstm_kernel(num_layers, T, B, H)

    return pl.pallas_call(
        kernel,
        out_shape=jax.ShapeDtypeStruct((B, O), jnp.float32),
        grid=(1,),
        in_specs=in_specs,
        out_specs=pl.BlockSpec((B, O), lambda i: (0, 0)),
        compiler_params=pltpu.CompilerParams(
            dimension_semantics=("arbitrary",)),
    )(*inputs)


# ---------------------------------------------------------------------------
# Pure-JAX reference (for a correctness check), f32 throughout.
# ---------------------------------------------------------------------------
def reference_forward(x_btd, params):
    x = jnp.transpose(x_btd, (1, 0, 2))             # (T, B, D)
    for (w_ih, w_hh, b_ih, b_hh) in params["lstm"]:
        H = w_hh.shape[1]
        B = x.shape[1]
        h0 = jnp.zeros((B, H), jnp.float32)
        c0 = jnp.zeros((B, H), jnp.float32)

        def step(carry, x_t):
            h, c = carry
            g = x_t @ w_ih.T + h @ w_hh.T + b_ih + b_hh
            i = jax.nn.sigmoid(g[:, 0 * H:1 * H])
            f = jax.nn.sigmoid(g[:, 1 * H:2 * H])
            gg = jnp.tanh(g[:, 2 * H:3 * H])
            o = jax.nn.sigmoid(g[:, 3 * H:4 * H])
            c = f * c + i * gg
            h = o * jnp.tanh(c)
            return (h, c), h

        (_, _), ys = lax.scan(step, (h0, c0), x)
        x = ys
    return x[-1] @ params["fc_w"].T + params["fc_b"]


# ---------------------------------------------------------------------------
# Deterministic parameter init (PyTorch-style uniform(-1/sqrt(H), 1/sqrt(H)))
# ---------------------------------------------------------------------------
def init_params(key, input_dim, hidden_dim, num_layers, output_dim):
    k = 1.0 / np.sqrt(hidden_dim)
    params = {"lstm": []}
    for layer in range(num_layers):
        d_in = input_dim if layer == 0 else hidden_dim
        key, k1, k2, k3, k4 = jax.random.split(key, 5)
        w_ih = jax.random.uniform(k1, (4 * hidden_dim, d_in), jnp.float32, -k, k)
        w_hh = jax.random.uniform(k2, (4 * hidden_dim, hidden_dim), jnp.float32, -k, k)
        b_ih = jax.random.uniform(k3, (4 * hidden_dim,), jnp.float32, -k, k)
        b_hh = jax.random.uniform(k4, (4 * hidden_dim,), jnp.float32, -k, k)
        params["lstm"].append((w_ih, w_hh, b_ih, b_hh))
    key, k5, k6 = jax.random.split(key, 3)
    params["fc_w"] = jax.random.uniform(k5, (output_dim, hidden_dim), jnp.float32, -k, k)
    params["fc_b"] = jax.random.uniform(k6, (output_dim,), jnp.float32, -k, k)
    return params


# ---------------------------------------------------------------------------
if __name__ == "__main__":
    # Small shapes consistent with the trajectory-prediction module.
    batch, seq, input_dim = 2, 8, 4
    hidden_dim, num_layers, output_dim = 32, 2, 2

    key = jax.random.PRNGKey(0)
    key, kx = jax.random.split(key)
    x = jax.random.normal(kx, (batch, seq, input_dim), jnp.float32)

    params = init_params(key, input_dim, hidden_dim, num_layers, output_dim)
    prepped = prepare_params(params)                 # once, outside jit

    out = lstm_model_forward(x, prepped)
    out = jax.block_until_ready(out)

    ref = reference_forward(x, params)
    # Tolerance relaxed for bf16 MXU operands (f32 accumulation + f32 gate math).
    np.testing.assert_allclose(np.asarray(out), np.asarray(ref), rtol=2e-2, atol=2e-2)

    assert out.shape == (batch, output_dim)
    print("KERNEL_OK")
</pallas_src>

<mosaic_0001>
module attributes {stable_mosaic.version = 11 : i64} {
  func.func @kernel(%arg0: i32, %arg1: memref<16x4xf32, #tpu.memory_space<vmem>>, %arg2: memref<4x128xbf16, #tpu.memory_space<vmem>>, %arg3: memref<32x128xbf16, #tpu.memory_space<vmem>>, %arg4: memref<1x128xf32, #tpu.memory_space<vmem>>, %arg5: memref<32x128xbf16, #tpu.memory_space<vmem>>, %arg6: memref<32x128xbf16, #tpu.memory_space<vmem>>, %arg7: memref<1x128xf32, #tpu.memory_space<vmem>>, %arg8: memref<32x2xbf16, #tpu.memory_space<vmem>>, %arg9: memref<1x2xf32, #tpu.memory_space<vmem>>, %arg10: memref<2x2xf32, #tpu.memory_space<vmem>>) attributes {dimension_semantics = [#tpu.dimension_semantics<arbitrary>], iteration_bounds = array<i64: 1>, scalar_prefetch = 0 : i64, scratch_operands = 0 : i64, tpu.core_type = #tpu.core_type<tc>, window_params = [{pipeline_mode = #tpu.pipeline_mode<synchronous>, transform_indices = @transform_0, window_bounds = array<i64: 16, 4>}, {pipeline_mode = #tpu.pipeline_mode<synchronous>, transform_indices = @transform_1, window_bounds = array<i64: 4, 128>}, {pipeline_mode = #tpu.pipeline_mode<synchronous>, transform_indices = @transform_2, window_bounds = array<i64: 32, 128>}, {pipeline_mode = #tpu.pipeline_mode<synchronous>, transform_indices = @transform_3, window_bounds = array<i64: 1, 128>}, {pipeline_mode = #tpu.pipeline_mode<synchronous>, transform_indices = @transform_4, window_bounds = array<i64: 32, 128>}, {pipeline_mode = #tpu.pipeline_mode<synchronous>, transform_indices = @transform_5, window_bounds = array<i64: 32, 128>}, {pipeline_mode = #tpu.pipeline_mode<synchronous>, transform_indices = @transform_6, window_bounds = array<i64: 1, 128>}, {pipeline_mode = #tpu.pipeline_mode<synchronous>, transform_indices = @transform_7, window_bounds = array<i64: 32, 2>}, {pipeline_mode = #tpu.pipeline_mode<synchronous>, transform_indices = @transform_8, window_bounds = array<i64: 1, 2>}, {pipeline_mode = #tpu.pipeline_mode<synchronous>, transform_indices = @transform_9, window_bounds = array<i64: 2, 2>}]} {
    %0 = tpu.iota {dimensions = array<i32: 1>} : vector<2x128xi32>
    %c64_i32 = arith.constant 64 : i32
    %1 = vector.broadcast %c64_i32 : i32 to vector<2x128xi32>
    %2 = arith.cmpi sge, %0, %1 : vector<2x128xi32>
    %c96_i32 = arith.constant 96 : i32
    %3 = vector.broadcast %c96_i32 : i32 to vector<2x128xi32>
    %4 = arith.cmpi slt, %0, %3 : vector<2x128xi32>
    %5 = arith.andi %2, %4 : vector<2x128xi1>
    %cst = arith.constant 1.000000e+00 : f32
    %cst_0 = arith.constant 5.000000e-01 : f32
    %6 = vector.broadcast %cst : f32 to vector<2x128xf32>
    %7 = vector.broadcast %cst_0 : f32 to vector<2x128xf32>
    %8 = arith.select %5, %6, %7 : vector<2x128xi1>, vector<2x128xf32>
    %cst_1 = arith.constant 0.000000e+00 : f32
    %cst_2 = arith.constant 5.000000e-01 : f32
    %9 = vector.broadcast %cst_1 : f32 to vector<2x128xf32>
    %10 = vector.broadcast %cst_2 : f32 to vector<2x128xf32>
    %11 = arith.select %5, %9, %10 : vector<2x128xi1>, vector<2x128xf32>
    %c0 = arith.constant 0 : index
    %c0_3 = arith.constant 0 : index
    %12 = vector.load %arg3[%c0, %c0_3] : memref<32x128xbf16, #tpu.memory_space<vmem>>, vector<32x128xbf16>
    %c0_4 = arith.constant 0 : index
    %c0_5 = arith.constant 0 : index
    %13 = vector.load %arg6[%c0_4, %c0_5] : memref<32x128xbf16, #tpu.memory_space<vmem>>, vector<32x128xbf16>
    %c0_6 = arith.constant 0 : index
    %c0_7 = arith.constant 0 : index
    %14 = vector.load %arg5[%c0_6, %c0_7] : memref<32x128xbf16, #tpu.memory_space<vmem>>, vector<32x128xbf16>
    %c0_8 = arith.constant 0 : index
    %c0_9 = arith.constant 0 : index
    %15 = vector.load %arg7[%c0_8, %c0_9] : memref<1x128xf32, #tpu.memory_space<vmem>>, vector<1x128xf32>
    %16 = vector.shape_cast %15 : vector<1x128xf32> to vector<1x128xf32>
    %17 = vector.broadcast %16 : vector<1x128xf32> to vector<2x128xf32>
    %c0_10 = arith.constant 0 : index
    %c0_11 = arith.constant 0 : index
    %18 = vector.load %arg1[%c0_10, %c0_11] : memref<16x4xf32, #tpu.memory_space<vmem>>, vector<16x4xf32>
    %19 = arith.truncf %18 : vector<16x4xf32> to vector<16x4xbf16>
    %c0_12 = arith.constant 0 : index
    %c0_13 = arith.constant 0 : index
    %20 = vector.load %arg2[%c0_12, %c0_13] : memref<4x128xbf16, #tpu.memory_space<vmem>>, vector<4x128xbf16>
    %cst_14 = arith.constant dense<0.000000e+00> : vector<16x128xf32>
    %21 = tpu.matmul %19, %20, %cst_14 {dimension_numbers = #tpu.dot_dimension_numbers<[1], [0], [0], [1], [0, 0, 1, 1], [], []>} : vector<16x4xbf16>, vector<4x128xbf16>, vector<16x128xf32> -> vector<16x128xf32>
    %c0_15 = arith.constant 0 : index
    %c0_16 = arith.constant 0 : index
    %22 = vector.load %arg4[%c0_15, %c0_16] : memref<1x128xf32, #tpu.memory_space<vmem>>, vector<1x128xf32>
    %23 = vector.broadcast %22 : vector<1x128xf32> to vector<16x128xf32>
    %24 = arith.addf %21, %23 : vector<16x128xf32>
    %cst_17 = arith.constant 0.000000e+00 : f32
    %25 = vector.broadcast %cst_17 : f32 to vector<2x32xf32>
    %cst_18 = arith.constant 0.000000e+00 : f32
    %26 = vector.broadcast %cst_18 : f32 to vector<2x32xf32>
    %cst_19 = arith.constant 0.000000e+00 : f32
    %27 = vector.broadcast %cst_19 : f32 to vector<2x32xf32>
    %cst_20 = arith.constant 0.000000e+00 : f32
    %28 = vector.broadcast %cst_20 : f32 to vector<2x32xf32>
    %29 = vector.extract_strided_slice %24 {offsets = [0, 0], sizes = [2, 128], strides = [1, 1]} : vector<16x128xf32> to vector<2x128xf32>
    %30 = arith.truncf %25 : vector<2x32xf32> to vector<2x32xbf16>
    %cst_21 = arith.constant dense<0.000000e+00> : vector<2x128xf32>
    %31 = tpu.matmul %30, %12, %cst_21 {dimension_numbers = #tpu.dot_dimension_numbers<[1], [0], [0], [1], [0, 0, 1, 1], [], []>} : vector<2x32xbf16>, vector<32x128xbf16>, vector<2x128xf32> -> vector<2x128xf32>
    %32 = arith.addf %29, %31 : vector<2x128xf32>
    %33 = arith.mulf %32, %8 : vector<2x128xf32>
    %34 = math.tanh %33 : vector<2x128xf32>
    %35 = arith.mulf %34, %8 : vector<2x128xf32>
    %36 = arith.addf %35, %11 : vector<2x128xf32>
    %37 = vector.extract_strided_slice %36 {offsets = [0, 0], sizes = [2, 32], strides = [1, 1]} : vector<2x128xf32> to vector<2x32xf32>
    %38 = vector.extract_strided_slice %36 {offsets = [0, 32], sizes = [2, 32], strides = [1, 1]} : vector<2x128xf32> to vector<2x32xf32>
    %39 = vector.extract_strided_slice %36 {offsets = [0, 64], sizes = [2, 32], strides = [1, 1]} : vector<2x128xf32> to vector<2x32xf32>
    %40 = vector.extract_strided_slice %36 {offsets = [0, 96], sizes = [2, 32], strides = [1, 1]} : vector<2x128xf32> to vector<2x32xf32>
    %41 = arith.mulf %38, %27 : vector<2x32xf32>
    %42 = arith.mulf %37, %39 : vector<2x32xf32>
    %43 = arith.addf %41, %42 : vector<2x32xf32>
    %44 = math.tanh %43 : vector<2x32xf32>
    %45 = arith.mulf %40, %44 : vector<2x32xf32>
    %46 = arith.truncf %45 : vector<2x32xf32> to vector<2x32xbf16>
    %cst_22 = arith.constant dense<0.000000e+00> : vector<2x128xf32>
    %47 = tpu.matmul %46, %14, %cst_22 {dimension_numbers = #tpu.dot_dimension_numbers<[1], [0], [0], [1], [0, 0, 1, 1], [], []>} : vector<2x32xbf16>, vector<32x128xbf16>, vector<2x128xf32> -> vector<2x128xf32>
    %48 = arith.addf %47, %17 : vector<2x128xf32>
    %49 = arith.truncf %26 : vector<2x32xf32> to vector<2x32xbf16>
    %cst_23 = arith.constant dense<0.000000e+00> : vector<2x128xf32>
    %50 = tpu.matmul %49, %13, %cst_23 {dimension_numbers = #tpu.dot_dimension_numbers<[1], [0], [0], [1], [0, 0, 1, 1], [], []>} : vector<2x32xbf16>, vector<32x128xbf16>, vector<2x128xf32> -> vector<2x128xf32>
    %51 = arith.addf %48, %50 : vector<2x128xf32>
    %52 = arith.mulf %51, %8 : vector<2x128xf32>
    %53 = math.tanh %52 : vector<2x128xf32>
    %54 = arith.mulf %53, %8 : vector<2x128xf32>
    %55 = arith.addf %54, %11 : vector<2x128xf32>
    %56 = vector.extract_strided_slice %55 {offsets = [0, 0], sizes = [2, 32], strides = [1, 1]} : vector<2x128xf32> to vector<2x32xf32>
    %57 = vector.extract_strided_slice %55 {offsets = [0, 32], sizes = [2, 32], strides = [1, 1]} : vector<2x128xf32> to vector<2x32xf32>
    %58 = vector.extract_strided_slice %55 {offsets = [0, 64], sizes = [2, 32], strides = [1, 1]} : vector<2x128xf32> to vector<2x32xf32>
    %59 = vector.extract_strided_slice %55 {offsets = [0, 96], sizes = [2, 32], strides = [1, 1]} : vector<2x128xf32> to vector<2x32xf32>
    %60 = arith.mulf %57, %28 : vector<2x32xf32>
    %61 = arith.mulf %56, %58 : vector<2x32xf32>
    %62 = arith.addf %60, %61 : vector<2x32xf32>
    %63 = math.tanh %62 : vector<2x32xf32>
    %64 = arith.mulf %59, %63 : vector<2x32xf32>
    %65 = vector.extract_strided_slice %24 {offsets = [2, 0], sizes = [2, 128], strides = [1, 1]} : vector<16x128xf32> to vector<2x128xf32>
    %66 = arith.truncf %45 : vector<2x32xf32> to vector<2x32xbf16>
    %cst_24 = arith.constant dense<0.000000e+00> : vector<2x128xf32>
    %67 = tpu.matmul %66, %12, %cst_24 {dimension_numbers = #tpu.dot_dimension_numbers<[1], [0], [0], [1], [0, 0, 1, 1], [], []>} : vector<2x32xbf16>, vector<32x128xbf16>, vector<2x128xf32> -> vector<2x128xf32>
    %68 = arith.addf %65, %67 : vector<2x128xf32>
    %69 = arith.mulf %68, %8 : vector<2x128xf32>
    %70 = math.tanh %69 : vector<2x128xf32>
    %71 = arith.mulf %70, %8 : vector<2x128xf32>
    %72 = arith.addf %71, %11 : vector<2x128xf32>
    %73 = vector.extract_strided_slice %72 {offsets = [0, 0], sizes = [2, 32], strides = [1, 1]} : vector<2x128xf32> to vector<2x32xf32>
    %74 = vector.extract_strided_slice %72 {offsets = [0, 32], sizes = [2, 32], strides = [1, 1]} : vector<2x128xf32> to vector<2x32xf32>
    %75 = vector.extract_strided_slice %72 {offsets = [0, 64], sizes = [2, 32], strides = [1, 1]} : vector<2x128xf32> to vector<2x32xf32>
    %76 = vector.extract_strided_slice %72 {offsets = [0, 96], sizes = [2, 32], strides = [1, 1]} : vector<2x128xf32> to vector<2x32xf32>
    %77 = arith.mulf %74, %43 : vector<2x32xf32>
    %78 = arith.mulf %73, %75 : vector<2x32xf32>
    %79 = arith.addf %77, %78 : vector<2x32xf32>
    %80 = math.tanh %79 : vector<2x32xf32>
    %81 = arith.mulf %76, %80 : vector<2x32xf32>
    %82 = arith.truncf %81 : vector<2x32xf32> to vector<2x32xbf16>
    %cst_25 = arith.constant dense<0.000000e+00> : vector<2x128xf32>
    %83 = tpu.matmul %82, %14, %cst_25 {dimension_numbers = #tpu.dot_dimension_numbers<[1], [0], [0], [1], [0, 0, 1, 1], [], []>} : vector<2x32xbf16>, vector<32x128xbf16>, vector<2x128xf32> -> vector<2x128xf32>
    %84 = arith.addf %83, %17 : vector<2x128xf32>
    %85 = arith.truncf %64 : vector<2x32xf32> to vector<2x32xbf16>
    %cst_26 = arith.constant dense<0.000000e+00> : vector<2x128xf32>
    %86 = tpu.matmul %85, %13, %cst_26 {dimension_numbers = #tpu.dot_dimension_numbers<[1], [0], [0], [1], [0, 0, 1, 1], [], []>} : vector<2x32xbf16>, vector<32x128xbf16>, vector<2x128xf32> -> vector<2x128xf32>
    %87 = arith.addf %84, %86 : vector<2x128xf32>
    %88 = arith.mulf %87, %8 : vector<2x128xf32>
    %89 = math.tanh %88 : vector<2x128xf32>
    %90 = arith.mulf %89, %8 : vector<2x128xf32>
    %91 = arith.addf %90, %11 : vector<2x128xf32>
    %92 = vector.extract_strided_slice %91 {offsets = [0, 0], sizes = [2, 32], strides = [1, 1]} : vector<2x128xf32> to vector<2x32xf32>
    %93 = vector.extract_strided_slice %91 {offsets = [0, 32], sizes = [2, 32], strides = [1, 1]} : vector<2x128xf32> to vector<2x32xf32>
    %94 = vector.extract_strided_slice %91 {offsets = [0, 64], sizes = [2, 32], strides = [1, 1]} : vector<2x128xf32> to vector<2x32xf32>
    %95 = vector.extract_strided_slice %91 {offsets = [0, 96], sizes = [2, 32], strides = [1, 1]} : vector<2x128xf32> to vector<2x32xf32>
    %96 = arith.mulf %93, %62 : vector<2x32xf32>
    %97 = arith.mulf %92, %94 : vector<2x32xf32>
    %98 = arith.addf %96, %97 : vector<2x32xf32>
    %99 = math.tanh %98 : vector<2x32xf32>
    %100 = arith.mulf %95, %99 : vector<2x32xf32>
    %101 = vector.extract_strided_slice %24 {offsets = [4, 0], sizes = [2, 128], strides = [1, 1]} : vector<16x128xf32> to vector<2x128xf32>
    %102 = arith.truncf %81 : vector<2x32xf32> to vector<2x32xbf16>
    %cst_27 = arith.constant dense<0.000000e+00> : vector<2x128xf32>
    %103 = tpu.matmul %102, %12, %cst_27 {dimension_numbers = #tpu.dot_dimension_numbers<[1], [0], [0], [1], [0, 0, 1, 1], [], []>} : vector<2x32xbf16>, vector<32x128xbf16>, vector<2x128xf32> -> vector<2x128xf32>
    %104 = arith.addf %101, %103 : vector<2x128xf32>
    %105 = arith.mulf %104, %8 : vector<2x128xf32>
    %106 = math.tanh %105 : vector<2x128xf32>
    %107 = arith.mulf %106, %8 : vector<2x128xf32>
    %108 = arith.addf %107, %11 : vector<2x128xf32>
    %109 = vector.extract_strided_slice %108 {offsets = [0, 0], sizes = [2, 32], strides = [1, 1]} : vector<2x128xf32> to vector<2x32xf32>
    %110 = vector.extract_strided_slice %108 {offsets = [0, 32], sizes = [2, 32], strides = [1, 1]} : vector<2x128xf32> to vector<2x32xf32>
    %111 = vector.extract_strided_slice %108 {offsets = [0, 64], sizes = [2, 32], strides = [1, 1]} : vector<2x128xf32> to vector<2x32xf32>
    %112 = vector.extract_strided_slice %108 {offsets = [0, 96], sizes = [2, 32], strides = [1, 1]} : vector<2x128xf32> to vector<2x32xf32>
    %113 = arith.mulf %110, %79 : vector<2x32xf32>
    %114 = arith.mulf %109, %111 : vector<2x32xf32>
    %115 = arith.addf %113, %114 : vector<2x32xf32>
    %116 = math.tanh %115 : vector<2x32xf32>
    %117 = arith.mulf %112, %116 : vector<2x32xf32>
    %118 = arith.truncf %117 : vector<2x32xf32> to vector<2x32xbf16>
    %cst_28 = arith.constant dense<0.000000e+00> : vector<2x128xf32>
    %119 = tpu.matmul %118, %14, %cst_28 {dimension_numbers = #tpu.dot_dimension_numbers<[1], [0], [0], [1], [0, 0, 1, 1], [], []>} : vector<2x32xbf16>, vector<32x128xbf16>, vector<2x128xf32> -> vector<2x128xf32>
    %120 = arith.addf %119, %17 : vector<2x128xf32>
    %121 = arith.truncf %100 : vector<2x32xf32> to vector<2x32xbf16>
    %cst_29 = arith.constant dense<0.000000e+00> : vector<2x128xf32>
    %122 = tpu.matmul %121, %13, %cst_29 {dimension_numbers = #tpu.dot_dimension_numbers<[1], [0], [0], [1], [0, 0, 1, 1], [], []>} : vector<2x32xbf16>, vector<32x128xbf16>, vector<2x128xf32> -> vector<2x128xf32>
    %123 = arith.addf %120, %122 : vector<2x128xf32>
    %124 = arith.mulf %123, %8 : vector<2x128xf32>
    %125 = math.tanh %124 : vector<2x128xf32>
    %126 = arith.mulf %125, %8 : vector<2x128xf32>
    %127 = arith.addf %126, %11 : vector<2x128xf32>
    %128 = vector.extract_strided_slice %127 {offsets = [0, 0], sizes = [2, 32], strides = [1, 1]} : vector<2x128xf32> to vector<2x32xf32>
    %129 = vector.extract_strided_slice %127 {offsets = [0, 32], sizes = [2, 32], strides = [1, 1]} : vector<2x128xf32> to vector<2x32xf32>
    %130 = vector.extract_strided_slice %127 {offsets = [0, 64], sizes = [2, 32], strides = [1, 1]} : vector<2x128xf32> to vector<2x32xf32>
    %131 = vector.extract_strided_slice %127 {offsets = [0, 96], sizes = [2, 32], strides = [1, 1]} : vector<2x128xf32> to vector<2x32xf32>
    %132 = arith.mulf %129, %98 : vector<2x32xf32>
    %133 = arith.mulf %128, %130 : vector<2x32xf32>
    %134 = arith.addf %132, %133 : vector<2x32xf32>
    %135 = math.tanh %134 : vector<2x32xf32>
    %136 = arith.mulf %131, %135 : vector<2x32xf32>
    %137 = vector.extract_strided_slice %24 {offsets = [6, 0], sizes = [2, 128], strides = [1, 1]} : vector<16x128xf32> to vector<2x128xf32>
    %138 = arith.truncf %117 : vector<2x32xf32> to vector<2x32xbf16>
    %cst_30 = arith.constant dense<0.000000e+00> : vector<2x128xf32>
    %139 = tpu.matmul %138, %12, %cst_30 {dimension_numbers = #tpu.dot_dimension_numbers<[1], [0], [0], [1], [0, 0, 1, 1], [], []>} : vector<2x32xbf16>, vector<32x128xbf16>, vector<2x128xf32> -> vector<2x128xf32>
    %140 = arith.addf %137, %139 : vector<2x128xf32>
    %141 = arith.mulf %140, %8 : vector<2x128xf32>
    %142 = math.tanh %141 : vector<2x128xf32>
    %143 = arith.mulf %142, %8 : vector<2x128xf32>
    %144 = arith.addf %143, %11 : vector<2x128xf32>
    %145 = vector.extract_strided_slice %144 {offsets = [0, 0], sizes = [2, 32], strides = [1, 1]} : vector<2x128xf32> to vector<2x32xf32>
    %146 = vector.extract_strided_slice %144 {offsets = [0, 32], sizes = [2, 32], strides = [1, 1]} : vector<2x128xf32> to vector<2x32xf32>
    %147 = vector.extract_strided_slice %144 {offsets = [0, 64], sizes = [2, 32], strides = [1, 1]} : vector<2x128xf32> to vector<2x32xf32>
    %148 = vector.extract_strided_slice %144 {offsets = [0, 96], sizes = [2, 32], strides = [1, 1]} : vector<2x128xf32> to vector<2x32xf32>
    %149 = arith.mulf %146, %115 : vector<2x32xf32>
    %150 = arith.mulf %145, %147 : vector<2x32xf32>
    %151 = arith.addf %149, %150 : vector<2x32xf32>
    %152 = math.tanh %151 : vector<2x32xf32>
    %153 = arith.mulf %148, %152 : vector<2x32xf32>
    %154 = arith.truncf %153 : vector<2x32xf32> to vector<2x32xbf16>
    %cst_31 = arith.constant dense<0.000000e+00> : vector<2x128xf32>
    %155 = tpu.matmul %154, %14, %cst_31 {dimension_numbers = #tpu.dot_dimension_numbers<[1], [0], [0], [1], [0, 0, 1, 1], [], []>} : vector<2x32xbf16>, vector<32x128xbf16>, vector<2x128xf32> -> vector<2x128xf32>
    %156 = arith.addf %155, %17 : vector<2x128xf32>
    %157 = arith.truncf %136 : vector<2x32xf32> to vector<2x32xbf16>
    %cst_32 = arith.constant dense<0.000000e+00> : vector<2x128xf32>
    %158 = tpu.matmul %157, %13, %cst_32 {dimension_numbers = #tpu.dot_dimension_numbers<[1], [0], [0], [1], [0, 0, 1, 1], [], []>} : vector<2x32xbf16>, vector<32x128xbf16>, vector<2x128xf32> -> vector<2x128xf32>
    %159 = arith.addf %156, %158 : vector<2x128xf32>
    %160 = arith.mulf %159, %8 : vector<2x128xf32>
    %161 = math.tanh %160 : vector<2x128xf32>
    %162 = arith.mulf %161, %8 : vector<2x128xf32>
    %163 = arith.addf %162, %11 : vector<2x128xf32>
    %164 = vector.extract_strided_slice %163 {offsets = [0, 0], sizes = [2, 32], strides = [1, 1]} : vector<2x128xf32> to vector<2x32xf32>
    %165 = vector.extract_strided_slice %163 {offsets = [0, 32], sizes = [2, 32], strides = [1, 1]} : vector<2x128xf32> to vector<2x32xf32>
    %166 = vector.extract_strided_slice %163 {offsets = [0, 64], sizes = [2, 32], strides = [1, 1]} : vector<2x128xf32> to vector<2x32xf32>
    %167 = vector.extract_strided_slice %163 {offsets = [0, 96], sizes = [2, 32], strides = [1, 1]} : vector<2x128xf32> to vector<2x32xf32>
    %168 = arith.mulf %165, %134 : vector<2x32xf32>
    %169 = arith.mulf %164, %166 : vector<2x32xf32>
    %170 = arith.addf %168, %169 : vector<2x32xf32>
    %171 = math.tanh %170 : vector<2x32xf32>
    %172 = arith.mulf %167, %171 : vector<2x32xf32>
    %173 = vector.extract_strided_slice %24 {offsets = [8, 0], sizes = [2, 128], strides = [1, 1]} : vector<16x128xf32> to vector<2x128xf32>
    %174 = arith.truncf %153 : vector<2x32xf32> to vector<2x32xbf16>
    %cst_33 = arith.constant dense<0.000000e+00> : vector<2x128xf32>
    %175 = tpu.matmul %174, %12, %cst_33 {dimension_numbers = #tpu.dot_dimension_numbers<[1], [0], [0], [1], [0, 0, 1, 1], [], []>} : vector<2x32xbf16>, vector<32x128xbf16>, vector<2x128xf32> -> vector<2x128xf32>
    %176 = arith.addf %173, %175 : vector<2x128xf32>
    %177 = arith.mulf %176, %8 : vector<2x128xf32>
    %178 = math.tanh %177 : vector<2x128xf32>
    %179 = arith.mulf %178, %8 : vector<2x128xf32>
    %180 = arith.addf %179, %11 : vector<2x128xf32>
    %181 = vector.extract_strided_slice %180 {offsets = [0, 0], sizes = [2, 32], strides = [1, 1]} : vector<2x128xf32> to vector<2x32xf32>
    %182 = vector.extract_strided_slice %180 {offsets = [0, 32], sizes = [2, 32], strides = [1, 1]} : vector<2x128xf32> to vector<2x32xf32>
    %183 = vector.extract_strided_slice %180 {offsets = [0, 64], sizes = [2, 32], strides = [1, 1]} : vector<2x128xf32> to vector<2x32xf32>
    %184 = vector.extract_strided_slice %180 {offsets = [0, 96], sizes = [2, 32], strides = [1, 1]} : vector<2x128xf32> to vector<2x32xf32>
    %185 = arith.mulf %182, %151 : vector<2x32xf32>
    %186 = arith.mulf %181, %183 : vector<2x32xf32>
    %187 = arith.addf %185, %186 : vector<2x32xf32>
    %188 = math.tanh %187 : vector<2x32xf32>
    %189 = arith.mulf %184, %188 : vector<2x32xf32>
    %190 = arith.truncf %189 : vector<2x32xf32> to vector<2x32xbf16>
    %cst_34 = arith.constant dense<0.000000e+00> : vector<2x128xf32>
    %191 = tpu.matmul %190, %14, %cst_34 {dimension_numbers = #tpu.dot_dimension_numbers<[1], [0], [0], [1], [0, 0, 1, 1], [], []>} : vector<2x32xbf16>, vector<32x128xbf16>, vector<2x128xf32> -> vector<2x128xf32>
    %192 = arith.addf %191, %17 : vector<2x128xf32>
    %193 = arith.truncf %172 : vector<2x32xf32> to vector<2x32xbf16>
    %cst_35 = arith.constant dense<0.000000e+00> : vector<2x128xf32>
    %194 = tpu.matmul %193, %13, %cst_35 {dimension_numbers = #tpu.dot_dimension_numbers<[1], [0], [0], [1], [0, 0, 1, 1], [], []>} : vector<2x32xbf16>, vector<32x128xbf16>, vector<2x128xf32> -> vector<2x128xf32>
    %195 = arith.addf %192, %194 : vector<2x128xf32>
    %196 = arith.mulf %195, %8 : vector<2x128xf32>
    %197 = math.tanh %196 : vector<2x128xf32>
    %198 = arith.mulf %197, %8 : vector<2x128xf32>
    %199 = arith.addf %198, %11 : vector<2x128xf32>
    %200 = vector.extract_strided_slice %199 {offsets = [0, 0], sizes = [2, 32], strides = [1, 1]} : vector<2x128xf32> to vector<2x32xf32>
    %201 = vector.extract_strided_slice %199 {offsets = [0, 32], sizes = [2, 32], strides = [1, 1]} : vector<2x128xf32> to vector<2x32xf32>
    %202 = vector.extract_strided_slice %199 {offsets = [0, 64], sizes = [2, 32], strides = [1, 1]} : vector<2x128xf32> to vector<2x32xf32>
    %203 = vector.extract_strided_slice %199 {offsets = [0, 96], sizes = [2, 32], strides = [1, 1]} : vector<2x128xf32> to vector<2x32xf32>
    %204 = arith.mulf %201, %170 : vector<2x32xf32>
    %205 = arith.mulf %200, %202 : vector<2x32xf32>
    %206 = arith.addf %204, %205 : vector<2x32xf32>
    %207 = math.tanh %206 : vector<2x32xf32>
    %208 = arith.mulf %203, %207 : vector<2x32xf32>
    %209 = vector.extract_strided_slice %24 {offsets = [10, 0], sizes = [2, 128], strides = [1, 1]} : vector<16x128xf32> to vector<2x128xf32>
    %210 = arith.truncf %189 : vector<2x32xf32> to vector<2x32xbf16>
    %cst_36 = arith.constant dense<0.000000e+00> : vector<2x128xf32>
    %211 = tpu.matmul %210, %12, %cst_36 {dimension_numbers = #tpu.dot_dimension_numbers<[1], [0], [0], [1], [0, 0, 1, 1], [], []>} : vector<2x32xbf16>, vector<32x128xbf16>, vector<2x128xf32> -> vector<2x128xf32>
    %212 = arith.addf %209, %211 : vector<2x128xf32>
    %213 = arith.mulf %212, %8 : vector<2x128xf32>
    %214 = math.tanh %213 : vector<2x128xf32>
    %215 = arith.mulf %214, %8 : vector<2x128xf32>
    %216 = arith.addf %215, %11 : vector<2x128xf32>
    %217 = vector.extract_strided_slice %216 {offsets = [0, 0], sizes = [2, 32], strides = [1, 1]} : vector<2x128xf32> to vector<2x32xf32>
    %218 = vector.extract_strided_slice %216 {offsets = [0, 32], sizes = [2, 32], strides = [1, 1]} : vector<2x128xf32> to vector<2x32xf32>
    %219 = vector.extract_strided_slice %216 {offsets = [0, 64], sizes = [2, 32], strides = [1, 1]} : vector<2x128xf32> to vector<2x32xf32>
    %220 = vector.extract_strided_slice %216 {offsets = [0, 96], sizes = [2, 32], strides = [1, 1]} : vector<2x128xf32> to vector<2x32xf32>
    %221 = arith.mulf %218, %187 : vector<2x32xf32>
    %222 = arith.mulf %217, %219 : vector<2x32xf32>
    %223 = arith.addf %221, %222 : vector<2x32xf32>
    %224 = math.tanh %223 : vector<2x32xf32>
    %225 = arith.mulf %220, %224 : vector<2x32xf32>
    %226 = arith.truncf %225 : vector<2x32xf32> to vector<2x32xbf16>
    %cst_37 = arith.constant dense<0.000000e+00> : vector<2x128xf32>
    %227 = tpu.matmul %226, %14, %cst_37 {dimension_numbers = #tpu.dot_dimension_numbers<[1], [0], [0], [1], [0, 0, 1, 1], [], []>} : vector<2x32xbf16>, vector<32x128xbf16>, vector<2x128xf32> -> vector<2x128xf32>
    %228 = arith.addf %227, %17 : vector<2x128xf32>
    %229 = arith.truncf %208 : vector<2x32xf32> to vector<2x32xbf16>
    %cst_38 = arith.constant dense<0.000000e+00> : vector<2x128xf32>
    %230 = tpu.matmul %229, %13, %cst_38 {dimension_numbers = #tpu.dot_dimension_numbers<[1], [0], [0], [1], [0, 0, 1, 1], [], []>} : vector<2x32xbf16>, vector<32x128xbf16>, vector<2x128xf32> -> vector<2x128xf32>
    %231 = arith.addf %228, %230 : vector<2x128xf32>
    %232 = arith.mulf %231, %8 : vector<2x128xf32>
    %233 = math.tanh %232 : vector<2x128xf32>
    %234 = arith.mulf %233, %8 : vector<2x128xf32>
    %235 = arith.addf %234, %11 : vector<2x128xf32>
    %236 = vector.extract_strided_slice %235 {offsets = [0, 0], sizes = [2, 32], strides = [1, 1]} : vector<2x128xf32> to vector<2x32xf32>
    %237 = vector.extract_strided_slice %235 {offsets = [0, 32], sizes = [2, 32], strides = [1, 1]} : vector<2x128xf32> to vector<2x32xf32>
    %238 = vector.extract_strided_slice %235 {offsets = [0, 64], sizes = [2, 32], strides = [1, 1]} : vector<2x128xf32> to vector<2x32xf32>
    %239 = vector.extract_strided_slice %235 {offsets = [0, 96], sizes = [2, 32], strides = [1, 1]} : vector<2x128xf32> to vector<2x32xf32>
    %240 = arith.mulf %237, %206 : vector<2x32xf32>
    %241 = arith.mulf %236, %238 : vector<2x32xf32>
    %242 = arith.addf %240, %241 : vector<2x32xf32>
    %243 = math.tanh %242 : vector<2x32xf32>
    %244 = arith.mulf %239, %243 : vector<2x32xf32>
    %245 = vector.extract_strided_slice %24 {offsets = [12, 0], sizes = [2, 128], strides = [1, 1]} : vector<16x128xf32> to vector<2x128xf32>
    %246 = arith.truncf %225 : vector<2x32xf32> to vector<2x32xbf16>
    %cst_39 = arith.constant dense<0.000000e+00> : vector<2x128xf32>
    %247 = tpu.matmul %246, %12, %cst_39 {dimension_numbers = #tpu.dot_dimension_numbers<[1], [0], [0], [1], [0, 0, 1, 1], [], []>} : vector<2x32xbf16>, vector<32x128xbf16>, vector<2x128xf32> -> vector<2x128xf32>
    %248 = arith.addf %245, %247 : vector<2x128xf32>
    %249 = arith.mulf %248, %8 : vector<2x128xf32>
    %250 = math.tanh %249 : vector<2x128xf32>
    %251 = arith.mulf %250, %8 : vector<2x128xf32>
    %252 = arith.addf %251, %11 : vector<2x128xf32>
    %253 = vector.extract_strided_slice %252 {offsets = [0, 0], sizes = [2, 32], strides = [1, 1]} : vector<2x128xf32> to vector<2x32xf32>
    %254 = vector.extract_strided_slice %252 {offsets = [0, 32], sizes = [2, 32], strides = [1, 1]} : vector<2x128xf32> to vector<2x32xf32>
    %255 = vector.extract_strided_slice %252 {offsets = [0, 64], sizes = [2, 32], strides = [1, 1]} : vector<2x128xf32> to vector<2x32xf32>
    %256 = vector.extract_strided_slice %252 {offsets = [0, 96], sizes = [2, 32], strides = [1, 1]} : vector<2x128xf32> to vector<2x32xf32>
    %257 = arith.mulf %254, %223 : vector<2x32xf32>
    %258 = arith.mulf %253, %255 : vector<2x32xf32>
    %259 = arith.addf %257, %258 : vector<2x32xf32>
    %260 = math.tanh %259 : vector<2x32xf32>
    %261 = arith.mulf %256, %260 : vector<2x32xf32>
    %262 = arith.truncf %261 : vector<2x32xf32> to vector<2x32xbf16>
    %cst_40 = arith.constant dense<0.000000e+00> : vector<2x128xf32>
    %263 = tpu.matmul %262, %14, %cst_40 {dimension_numbers = #tpu.dot_dimension_numbers<[1], [0], [0], [1], [0, 0, 1, 1], [], []>} : vector<2x32xbf16>, vector<32x128xbf16>, vector<2x128xf32> -> vector<2x128xf32>
    %264 = arith.addf %263, %17 : vector<2x128xf32>
    %265 = arith.truncf %244 : vector<2x32xf32> to vector<2x32xbf16>
    %cst_41 = arith.constant dense<0.000000e+00> : vector<2x128xf32>
    %266 = tpu.matmul %265, %13, %cst_41 {dimension_numbers = #tpu.dot_dimension_numbers<[1], [0], [0], [1], [0, 0, 1, 1], [], []>} : vector<2x32xbf16>, vector<32x128xbf16>, vector<2x128xf32> -> vector<2x128xf32>
    %267 = arith.addf %264, %266 : vector<2x128xf32>
    %268 = arith.mulf %267, %8 : vector<2x128xf32>
    %269 = math.tanh %268 : vector<2x128xf32>
    %270 = arith.mulf %269, %8 : vector<2x128xf32>
    %271 = arith.addf %270, %11 : vector<2x128xf32>
    %272 = vector.extract_strided_slice %271 {offsets = [0, 0], sizes = [2, 32], strides = [1, 1]} : vector<2x128xf32> to vector<2x32xf32>
    %273 = vector.extract_strided_slice %271 {offsets = [0, 32], sizes = [2, 32], strides = [1, 1]} : vector<2x128xf32> to vector<2x32xf32>
    %274 = vector.extract_strided_slice %271 {offsets = [0, 64], sizes = [2, 32], strides = [1, 1]} : vector<2x128xf32> to vector<2x32xf32>
    %275 = vector.extract_strided_slice %271 {offsets = [0, 96], sizes = [2, 32], strides = [1, 1]} : vector<2x128xf32> to vector<2x32xf32>
    %276 = arith.mulf %273, %242 : vector<2x32xf32>
    %277 = arith.mulf %272, %274 : vector<2x32xf32>
    %278 = arith.addf %276, %277 : vector<2x32xf32>
    %279 = math.tanh %278 : vector<2x32xf32>
    %280 = arith.mulf %275, %279 : vector<2x32xf32>
    %281 = vector.extract_strided_slice %24 {offsets = [14, 0], sizes = [2, 128], strides = [1, 1]} : vector<16x128xf32> to vector<2x128xf32>
    %282 = arith.truncf %261 : vector<2x32xf32> to vector<2x32xbf16>
    %cst_42 = arith.constant dense<0.000000e+00> : vector<2x128xf32>
    %283 = tpu.matmul %282, %12, %cst_42 {dimension_numbers = #tpu.dot_dimension_numbers<[1], [0], [0], [1], [0, 0, 1, 1], [], []>} : vector<2x32xbf16>, vector<32x128xbf16>, vector<2x128xf32> -> vector<2x128xf32>
    %284 = arith.addf %281, %283 : vector<2x128xf32>
    %285 = arith.mulf %284, %8 : vector<2x128xf32>
    %286 = math.tanh %285 : vector<2x128xf32>
    %287 = arith.mulf %286, %8 : vector<2x128xf32>
    %288 = arith.addf %287, %11 : vector<2x128xf32>
    %289 = vector.extract_strided_slice %288 {offsets = [0, 0], sizes = [2, 32], strides = [1, 1]} : vector<2x128xf32> to vector<2x32xf32>
    %290 = vector.extract_strided_slice %288 {offsets = [0, 32], sizes = [2, 32], strides = [1, 1]} : vector<2x128xf32> to vector<2x32xf32>
    %291 = vector.extract_strided_slice %288 {offsets = [0, 64], sizes = [2, 32], strides = [1, 1]} : vector<2x128xf32> to vector<2x32xf32>
    %292 = vector.extract_strided_slice %288 {offsets = [0, 96], sizes = [2, 32], strides = [1, 1]} : vector<2x128xf32> to vector<2x32xf32>
    %293 = arith.mulf %290, %259 : vector<2x32xf32>
    %294 = arith.mulf %289, %291 : vector<2x32xf32>
    %295 = arith.addf %293, %294 : vector<2x32xf32>
    %296 = math.tanh %295 : vector<2x32xf32>
    %297 = arith.mulf %292, %296 : vector<2x32xf32>
    %298 = arith.truncf %297 : vector<2x32xf32> to vector<2x32xbf16>
    %cst_43 = arith.constant dense<0.000000e+00> : vector<2x128xf32>
    %299 = tpu.matmul %298, %14, %cst_43 {dimension_numbers = #tpu.dot_dimension_numbers<[1], [0], [0], [1], [0, 0, 1, 1], [], []>} : vector<2x32xbf16>, vector<32x128xbf16>, vector<2x128xf32> -> vector<2x128xf32>
    %300 = arith.addf %299, %17 : vector<2x128xf32>
    %301 = arith.truncf %280 : vector<2x32xf32> to vector<2x32xbf16>
    %cst_44 = arith.constant dense<0.000000e+00> : vector<2x128xf32>
    %302 = tpu.matmul %301, %13, %cst_44 {dimension_numbers = #tpu.dot_dimension_numbers<[1], [0], [0], [1], [0, 0, 1, 1], [], []>} : vector<2x32xbf16>, vector<32x128xbf16>, vector<2x128xf32> -> vector<2x128xf32>
    %303 = arith.addf %300, %302 : vector<2x128xf32>
    %304 = arith.mulf %303, %8 : vector<2x128xf32>
    %305 = math.tanh %304 : vector<2x128xf32>
    %306 = arith.mulf %305, %8 : vector<2x128xf32>
    %307 = arith.addf %306, %11 : vector<2x128xf32>
    %308 = vector.extract_strided_slice %307 {offsets = [0, 0], sizes = [2, 32], strides = [1, 1]} : vector<2x128xf32> to vector<2x32xf32>
    %309 = vector.extract_strided_slice %307 {offsets = [0, 32], sizes = [2, 32], strides = [1, 1]} : vector<2x128xf32> to vector<2x32xf32>
    %310 = vector.extract_strided_slice %307 {offsets = [0, 64], sizes = [2, 32], strides = [1, 1]} : vector<2x128xf32> to vector<2x32xf32>
    %311 = vector.extract_strided_slice %307 {offsets = [0, 96], sizes = [2, 32], strides = [1, 1]} : vector<2x128xf32> to vector<2x32xf32>
    %312 = arith.mulf %309, %278 : vector<2x32xf32>
    %313 = arith.mulf %308, %310 : vector<2x32xf32>
    %314 = arith.addf %312, %313 : vector<2x32xf32>
    %315 = math.tanh %314 : vector<2x32xf32>
    %316 = arith.mulf %311, %315 : vector<2x32xf32>
    %317 = arith.truncf %316 : vector<2x32xf32> to vector<2x32xbf16>
    %c0_45 = arith.constant 0 : index
    %c0_46 = arith.constant 0 : index
    %318 = vector.load %arg8[%c0_45, %c0_46] : memref<32x2xbf16, #tpu.memory_space<vmem>>, vector<32x2xbf16>
    %cst_47 = arith.constant dense<0.000000e+00> : vector<2x2xf32>
    %319 = tpu.matmul %317, %318, %cst_47 {dimension_numbers = #tpu.dot_dimension_numbers<[1], [0], [0], [1], [0, 0, 1, 1], [], []>} : vector<2x32xbf16>, vector<32x2xbf16>, vector<2x2xf32> -> vector<2x2xf32>
    %c0_48 = arith.constant 0 : index
    %c0_49 = arith.constant 0 : index
    %320 = vector.load %arg9[%c0_48, %c0_49] : memref<1x2xf32, #tpu.memory_space<vmem>>, vector<1x2xf32>
    %321 = vector.broadcast %320 : vector<1x2xf32> to vector<2x2xf32>
    %322 = arith.addf %319, %321 : vector<2x2xf32>
    %c0_50 = arith.constant 0 : index
    %c0_51 = arith.constant 0 : index
    %323 = vector.load %arg10[%c0_50, %c0_51] : memref<2x2xf32, #tpu.memory_space<vmem>>, vector<2x2xf32>
    tpu.vector_store %arg10[%c0_50, %c0_51], %322 {strides = array<i32>} : memref<2x2xf32, #tpu.memory_space<vmem>>, vector<2x2xf32>,
    return
  }
  func.func @transform_0(%arg0: i32) -> (i32, i32) {
    %c0_i32 = arith.constant 0 : i32
    %c0_i32_0 = arith.constant 0 : i32
    %c0_i32_1 = arith.constant 0 : i32
    return %c0_i32, %c0_i32_0 : i32, i32
  }
  func.func @transform_1(%arg0: i32) -> (i32, i32) {
    %c0_i32 = arith.constant 0 : i32
    %c0_i32_0 = arith.constant 0 : i32
    %c0_i32_1 = arith.constant 0 : i32
    return %c0_i32, %c0_i32_0 : i32, i32
  }
  func.func @transform_2(%arg0: i32) -> (i32, i32) {
    %c0_i32 = arith.constant 0 : i32
    %c0_i32_0 = arith.constant 0 : i32
    %c0_i32_1 = arith.constant 0 : i32
    return %c0_i32, %c0_i32_0 : i32, i32
  }
  func.func @transform_3(%arg0: i32) -> (i32, i32) {
    %c0_i32 = arith.constant 0 : i32
    %c0_i32_0 = arith.constant 0 : i32
    %c0_i32_1 = arith.constant 0 : i32
    return %c0_i32, %c0_i32_0 : i32, i32
  }
  func.func @transform_4(%arg0: i32) -> (i32, i32) {
    %c0_i32 = arith.constant 0 : i32
    %c0_i32_0 = arith.constant 0 : i32
    %c0_i32_1 = arith.constant 0 : i32
    return %c0_i32, %c0_i32_0 : i32, i32
  }
  func.func @transform_5(%arg0: i32) -> (i32, i32) {
    %c0_i32 = arith.constant 0 : i32
    %c0_i32_0 = arith.constant 0 : i32
    %c0_i32_1 = arith.constant 0 : i32
    return %c0_i32, %c0_i32_0 : i32, i32
  }
  func.func @transform_6(%arg0: i32) -> (i32, i32) {
    %c0_i32 = arith.constant 0 : i32
    %c0_i32_0 = arith.constant 0 : i32
    %c0_i32_1 = arith.constant 0 : i32
    return %c0_i32, %c0_i32_0 : i32, i32
  }
  func.func @transform_7(%arg0: i32) -> (i32, i32) {
    %c0_i32 = arith.constant 0 : i32
    %c0_i32_0 = arith.constant 0 : i32
    %c0_i32_1 = arith.constant 0 : i32
    return %c0_i32, %c0_i32_0 : i32, i32
  }
  func.func @transform_8(%arg0: i32) -> (i32, i32) {
    %c0_i32 = arith.constant 0 : i32
    %c0_i32_0 = arith.constant 0 : i32
    %c0_i32_1 = arith.constant 0 : i32
    return %c0_i32, %c0_i32_0 : i32, i32
  }
  func.func @transform_9(%arg0: i32) -> (i32, i32) {
    %c0_i32 = arith.constant 0 : i32
    %c0_i32_0 = arith.constant 0 : i32
    %c0_i32_1 = arith.constant 0 : i32
    return %c0_i32, %c0_i32_0 : i32, i32
  }
}

</mosaic_0001>

<llo_original>
// kernel: lstm_model_forward.1
$region0: #{lstm_model_forward.1}
  #allocation0 [shape = 'u32[]', space=smem, size = 0x4, offset = 0x4, fixed_abs, tag = 'smem constant byte address 0x4 - core index']
  #allocation1 [shape = 'u32[72,128]{1,0:T(1,128)}', space=vmem, size = 0x9000, scoped, tag = 'internal scratch']
  %s0 = inlined_call_operand.vmem [shape: f32[16,4], index: 0, kind: input, shape index: {}]
  %s1 = inlined_call_operand.hbm [shape: bf16[4,128], index: 1, kind: input, shape index: {}]
  %s2 = inlined_call_operand.vmem [shape: bf16[32,128], index: 2, kind: input, shape index: {}]
  %s3 = inlined_call_operand.hbm [shape: f32[1,128], index: 3, kind: input, shape index: {}]
  %s4 = inlined_call_operand.vmem [shape: bf16[32,128], index: 4, kind: input, shape index: {}]
  %s5 = inlined_call_operand.vmem [shape: bf16[32,128], index: 5, kind: input, shape index: {}]
  %s6 = inlined_call_operand.vmem [shape: f32[1,128], index: 6, kind: input, shape index: {}]
  %s7 = inlined_call_operand.vmem [shape: bf16[32,2], index: 7, kind: input, shape index: {}]
  %s8 = inlined_call_operand.hbm [shape: f32[1,2], index: 8, kind: input, shape index: {}]
  %s9 = inlined_call_operand.hbm [shape: f32[2,2], index: 9, kind: output, shape index: {}]
  %s10 = sld [smem:[#allocation0]]
  $region58: #{lstm_model_forward.1} parent=0
    _
  %s12 = ssub.s32 1, %s10
  %s13 = scalar_select 0, %s12, %s10
  $region1: #{lstm_model_forward.1} parent=0
    #allocation2 [shape = 'u8[1024]{0}', space=vmem, size = 0x400, scoped, tag = 'input window, operand 1, single buffered']
    #allocation3 [shape = 's32[1]{0}', space=sflag, size = 0x4, scoped, tag = 'scoped memory for lstm_model_forward.1']
    #allocation4 [shape = 's32[1]{0}', space=sflag, size = 0x4, scoped, tag = 'scoped memory for lstm_model_forward.1']
    #allocation5 [shape = 'u8[512]{0}', space=vmem, size = 0x400, scoped, tag = 'input window, operand 3, single buffered']
    #allocation6 [shape = 's32[1]{0}', space=sflag, size = 0x4, scoped, tag = 'scoped memory for lstm_model_forward.1']
    #allocation7 [shape = 'u8[512]{0}', space=vmem, size = 0x400, scoped, tag = 'input window, operand 8, single buffered']
    #allocation8 [shape = 'u8[1024]{0}', space=vmem, size = 0x400, scoped, tag = 'output window, operand 0, single buffered']
    %14 = vsyncpa [#allocation3], 0
    %15 = vsyncpa [#allocation6], 0
    %16 = vsyncpa [#allocation4], 0
    // Predicated region
    $region2: #{lstm_model_forward.1} parent=1 // pred_check
      _
    $region3: #{lstm_model_forward.1} parent=1 // pred_check_branch
      %18 = sbr.rel (0) target = $region5
    $region4: #{lstm_model_forward.1} parent=1 // pred_region
      _
    $region5: #{lstm_model_forward.1} parent=1 // pred_fallthru
      _
    // Predicated region
    $region6: #{lstm_model_forward.1} parent=1 // pred_check
      _
    $region7: #{lstm_model_forward.1} parent=1 // pred_check_branch
      %20 = sbr.rel (0) target = $region9
    $region8: #{lstm_model_forward.1} parent=1 // pred_region
      %22 = vsyncadd [#allocation3], 0
      %s24 = sshll.u32 %s1, 4
      %s25 = int_to_ptr.hbm [resolvable:$true] %s24
      %s26 = sshll.u32 [#allocation2], 4
      %s27 = int_to_ptr.vmem [resolvable:$true] %s26
      %29 = dma.hbm_to_vmem [thread:$0]  %s25, 32, %s27, [#allocation3]
    $region9: #{lstm_model_forward.1} parent=1 // pred_fallthru
      _
    // Predicated region
    $region10: #{lstm_model_forward.1} parent=1 // pred_check
      _
    $region11: #{lstm_model_forward.1} parent=1 // pred_check_branch
      %31 = sbr.rel (0) target = $region13
    $region12: #{lstm_model_forward.1} parent=1 // pred_region
      _
    $region13: #{lstm_model_forward.1} parent=1 // pred_fallthru
      _
    // Predicated region
    $region14: #{lstm_model_forward.1} parent=1 // pred_check
      _
    $region15: #{lstm_model_forward.1} parent=1 // pred_check_branch
      %33 = sbr.rel (0) target = $region17
    $region16: #{lstm_model_forward.1} parent=1 // pred_region
      %35 = vsyncadd [#allocation6], 0
      %s37 = sshll.u32 %s3, 4
      %s38 = int_to_ptr.hbm [resolvable:$true] %s37
      %s39 = sshll.u32 [#allocation5], 4
      %s40 = int_to_ptr.vmem [resolvable:$true] %s39
      %42 = dma.hbm_to_vmem [thread:$0]  %s38, 16, %s40, [#allocation6]
    $region17: #{lstm_model_forward.1} parent=1 // pred_fallthru
      _
    // Predicated region
    $region18: #{lstm_model_forward.1} parent=1 // pred_check
      _
    $region19: #{lstm_model_forward.1} parent=1 // pred_check_branch
      %44 = sbr.rel (0) target = $region21
    $region20: #{lstm_model_forward.1} parent=1 // pred_region
      _
    $region21: #{lstm_model_forward.1} parent=1 // pred_fallthru
      _
    // Predicated region
    $region22: #{lstm_model_forward.1} parent=1 // pred_check
      _
    $region23: #{lstm_model_forward.1} parent=1 // pred_check_branch
      %46 = sbr.rel (0) target = $region25
    $region24: #{lstm_model_forward.1} parent=1 // pred_region
      _
    $region25: #{lstm_model_forward.1} parent=1 // pred_fallthru
      _
    // Predicated region
    $region26: #{lstm_model_forward.1} parent=1 // pred_check
      _
    $region27: #{lstm_model_forward.1} parent=1 // pred_check_branch
      %48 = sbr.rel (0) target = $region29
    $region28: #{lstm_model_forward.1} parent=1 // pred_region
      _
    $region29: #{lstm_model_forward.1} parent=1 // pred_fallthru
      _
    // Predicated region
    $region30: #{lstm_model_forward.1} parent=1 // pred_check
      _
    $region31: #{lstm_model_forward.1} parent=1 // pred_check_branch
      %50 = sbr.rel (0) target = $region33
    $region32: #{lstm_model_forward.1} parent=1 // pred_region
      _
    $region33: #{lstm_model_forward.1} parent=1 // pred_fallthru
      _
    // Predicated region
    $region34: #{lstm_model_forward.1} parent=1 // pred_check
      _
    $region35: #{lstm_model_forward.1} parent=1 // pred_check_branch
      %52 = sbr.rel (0) target = $region37
    $region36: #{lstm_model_forward.1} parent=1 // pred_region
      %54 = vsyncadd [#allocation6], 0
      %s56 = sshll.u32 %s8, 4
      %s57 = int_to_ptr.hbm [resolvable:$true] %s56
      %s58 = sshll.u32 [#allocation7], 4
      %s59 = int_to_ptr.vmem [resolvable:$true] %s58
      %61 = dma.hbm_to_vmem [thread:$0]  %s57, 16, %s59, [#allocation6]
    $region37: #{lstm_model_forward.1} parent=1 // pred_fallthru
      _
    // Predicated region
    $region38: #{lstm_model_forward.1} parent=1 // pred_check
      _
    $region39: #{lstm_model_forward.1} parent=1 // pred_check_branch
      %63 = sbr.rel (0) target = $region41
    $region40: #{lstm_model_forward.1} parent=1 // pred_region
      %65 = dma.done [#allocation3], 32
    $region41: #{lstm_model_forward.1} parent=1 // pred_fallthru
      _
    // Predicated region
    $region42: #{lstm_model_forward.1} parent=1 // pred_check
      _
    $region43: #{lstm_model_forward.1} parent=1 // pred_check_branch
      %67 = sbr.rel (0) target = $region45
    $region44: #{lstm_model_forward.1} parent=1 // pred_region
      %69 = dma.done [#allocation6], 16
    $region45: #{lstm_model_forward.1} parent=1 // pred_fallthru
      _
    // Predicated region
    $region46: #{lstm_model_forward.1} parent=1 // pred_check
      _
    $region47: #{lstm_model_forward.1} parent=1 // pred_check_branch
      %71 = sbr.rel (0) target = $region49
    $region48: #{lstm_model_forward.1} parent=1 // pred_region
      %73 = dma.done [#allocation6], 16
    $region49: #{lstm_model_forward.1} parent=1 // pred_fallthru
      _
    %v75 = vlaneseq
    %v76 = vand.u32 %v75, 127
    %vm77 = vcmp.ge.s32.totalorder %v76, 64
    %vm78 = vcmp.lt.s32.totalorder %v76, 96
    %vm79 = vmand %vm77, %vm78
    %v80 = vsel %vm79, 1.0, 0.5
    %v81 = vsel %vm79, 0.0, 0.5
    %v82 = vld [vmem:[%s2] sm:$0xf]
    %v83 = vld [vmem:[%s2 + $0x4] sm:$0xf]
    %v84 = vld [vmem:[%s2 + $0x8] sm:$0xf]
    %v85 = vld [vmem:[%s2 + $0xc] sm:$0xf]
    %v86 = vld [vmem:[%s5] sm:$0xf]
    %v87 = vld [vmem:[%s5 + $0x4] sm:$0xf]
    %v88 = vld [vmem:[%s5 + $0x8] sm:$0xf]
    %v89 = vld [vmem:[%s5 + $0xc] sm:$0xf]
    %v90 = vld [vmem:[%s4] sm:$0xf]
    %v91 = vld [vmem:[%s4 + $0x4] sm:$0xf]
    %v92 = vld [vmem:[%s4 + $0x8] sm:$0xf]
    %v93 = vld [vmem:[%s4 + $0xc] sm:$0xf]
    %v94 = vld [vmem:[%s6] sm:$0x1]
    %v96 = vperm.slane %v94, 0
    %v98 = vld [vmem:[%s0] sm:$0xff]
    %v99 = vld [vmem:[%s0 + $0x8] sm:$0xff]
    %v100 = vpack.c.bf16 %v99, %v98
    %v101 = vld [vmem:[#allocation2] sm:$0x3]
    %v102 = vld [vmem:[#allocation5] sm:$0x1]
    %v104 = vperm.slane %v102, 0
    %vm106 = vcmask 31744
    %v108 = vsel %vm106, %v100, 0
    %vm110 = vcmask 1041408
    %v112 = vsel %vm110, %v101, 0
    %114 = vmatpush.bf16.msra.mxu0 0
    %115 = vmatpush.bf16.msra.mxu0 0
    %116 = vmatpush.bf16.msra.mxu0 0
    %117 = vmatpush.bf16.msra.mxu0 0
    %118 = vmatpush.bf16.msra.mxu0 0
    %119 = vmatpush.bf16.msra.mxu0 0
    %120 = vmatpush.bf16.msra.mxu0 0
    %121 = vmatpush.bf16.msra.mxu0 %v112
    %122 = vmatmul.bf16.gmra.mxu0 %v108
    %v123 = vpop.f32.mrf.mxu0
    %v124 = vadd.f32 %v104, %v123
    %v125 = vpop.f32.mrf.mxu0
    %v126 = vadd.f32 %v104, %v125
    %127 = vdwg.mxu0
    %v132 = vunpack.c.l.b16 %v82
    %v133 = vunpack.c.l.b16 %v83
    %v134 = vunpack.c.l.b16 %v84
    %v135 = vunpack.c.l.b16 %v85
    %v136 = vpack.c.b16 %v133, %v132
    %v137 = vpack.c.b16 %v135, %v134
    %vm140 = vcmask 261120
    %v142 = vsel %vm140, 0, 0
    %144 = vmatpush.bf16.msra.mxu0 0
    %145 = vmatpush.bf16.msra.mxu0 0
    %146 = vmatpush.bf16.msra.mxu0 0
    %147 = vmatpush.bf16.msra.mxu0 0
    %148 = vmatpush.bf16.msra.mxu0 0
    %149 = vmatpush.bf16.msra.mxu0 0
    %150 = vmatpush.bf16.msra.mxu0 %v137
    %151 = vmatpush.bf16.msra.mxu0 %v136
    %152 = vmatmul.bf16.gmra.mxu0 %v142
    %v153 = vpop.f32.mrf.mxu0
    %v154 = vadd.f32 0.0, %v153
    %v155 = vpop.f32.mrf.mxu0
    %156 = vdwg.mxu0
    %v157 = vadd.f32 %v124, %v154
    %v158 = vmul.f32 %v157, %v80
    %v159 = vtanh.pop %v158
    %v160 = vmul.f32 %v159, %v80
    %v161 = vadd.f32 %v160, %v81
    %v162 = vmul.f32 %v161, 0.0
    %164 = vrot.lane.b32.xlu0 %v161, 64
    %v165 = vpop.permute.xlu0 %164
    %v167 = vmul.f32 %v161, %v165
    %169 = vrot.lane.b32.xlu0 %v167, 32
    %v170 = vpop.permute.xlu0 %169
    %v172 = vadd.f32 %v162, %v170
    %v173 = vtanh.pop %v172
    %175 = vrot.lane.b32.xlu0 %v173, 64
    %v176 = vpop.permute.xlu0 %175
    %v178 = vmul.f32 %v161, %v176
    %v179 = vpack.c.bf16 %v178, %v178
    %181 = vrot.lane.b32.xlu0 %v179, 32
    %v182 = vpop.permute.xlu0 %181
    %v187 = vunpack.c.l.b16 %v90
    %v188 = vunpack.c.l.b16 %v91
    %v189 = vunpack.c.l.b16 %v92
    %v190 = vunpack.c.l.b16 %v93
    %v191 = vpack.c.b16 %v188, %v187
    %v192 = vpack.c.b16 %v190, %v189
    %v196 = vsel %vm140, %v182, 0
    %198 = vmatpush.bf16.msra.mxu0 0
    %199 = vmatpush.bf16.msra.mxu0 0
    %200 = vmatpush.bf16.msra.mxu0 0
    %201 = vmatpush.bf16.msra.mxu0 0
    %202 = vmatpush.bf16.msra.mxu0 0
    %203 = vmatpush.bf16.msra.mxu0 0
    %204 = vmatpush.bf16.msra.mxu0 %v192
    %205 = vmatpush.bf16.msra.mxu0 %v191
    %206 = vmatmul.bf16.gmra.mxu0 %v196
    %v207 = vpop.f32.mrf.mxu0
    %v208 = vadd.f32 %v96, %v207
    %v209 = vpop.f32.mrf.mxu0
    %210 = vdwg.mxu0
    %v215 = vunpack.c.l.b16 %v86
    %v216 = vunpack.c.l.b16 %v87
    %v217 = vunpack.c.l.b16 %v88
    %v218 = vunpack.c.l.b16 %v89
    %v219 = vpack.c.b16 %v216, %v215
    %v220 = vpack.c.b16 %v218, %v217
    %223 = vmatpush.bf16.msra.mxu0 0
    %224 = vmatpush.bf16.msra.mxu0 0
    %225 = vmatpush.bf16.msra.mxu0 0
    %226 = vmatpush.bf16.msra.mxu0 0
    %227 = vmatpush.bf16.msra.mxu0 0
    %228 = vmatpush.bf16.msra.mxu0 0
    %229 = vmatpush.bf16.msra.mxu0 %v220
    %230 = vmatpush.bf16.msra.mxu0 %v219
    %231 = vmatmul.bf16.gmra.mxu0 %v142
    %v232 = vpop.f32.mrf.mxu0
    %v233 = vadd.f32 0.0, %v232
    %v234 = vpop.f32.mrf.mxu0
    %235 = vdwg.mxu0
    %v236 = vadd.f32 %v208, %v233
    %v237 = vmul.f32 %v236, %v80
    %v238 = vtanh.pop %v237
    %v239 = vmul.f32 %v238, %v80
    %v240 = vadd.f32 %v239, %v81
    %v241 = vmul.f32 %v240, 0.0
    %243 = vrot.lane.b32.xlu0 %v240, 64
    %v244 = vpop.permute.xlu0 %243
    %v246 = vmul.f32 %v240, %v244
    %248 = vrot.lane.b32.xlu0 %v246, 32
    %v249 = vpop.permute.xlu0 %248
    %v251 = vadd.f32 %v241, %v249
    %v252 = vtanh.pop %v251
    %254 = vrot.lane.b32.xlu0 %v252, 64
    %v255 = vpop.permute.xlu0 %254
    %v257 = vmul.f32 %v240, %v255
    %258 = vmatpush.bf16.msra.mxu0 0
    %259 = vmatpush.bf16.msra.mxu0 0
    %260 = vmatpush.bf16.msra.mxu0 0
    %261 = vmatpush.bf16.msra.mxu0 0
    %262 = vmatpush.bf16.msra.mxu0 0
    %263 = vmatpush.bf16.msra.mxu0 0
    %264 = vmatpush.bf16.msra.mxu0 %v137
    %265 = vmatpush.bf16.msra.mxu0 %v136
    %266 = vmatmul.bf16.gmra.mxu0 %v196
    %v267 = vpop.f32.mrf.mxu0
    %v268 = vadd.f32 0.0, %v267
    %v269 = vpop.f32.mrf.mxu0
    %270 = vdwg.mxu0
    %v272 = vrot.slane %v268, 6
    %v274 = vadd.f32 %v124, %v272
    %v275 = vmul.f32 %v274, %v80
    %v276 = vtanh.pop %v275
    %v277 = vmul.f32 %v276, %v80
    %v278 = vadd.f32 %v277, %v81
    %v280 = vrot.slane %v172, 6
    %v282 = vmul.f32 %v278, %v280
    %284 = vrot.lane.b32.xlu0 %v278, 64
    %v285 = vpop.permute.xlu0 %284
    %v287 = vmul.f32 %v278, %v285
    %289 = vrot.lane.b32.xlu0 %v287, 32
    %v290 = vpop.permute.xlu0 %289
    %v292 = vadd.f32 %v282, %v290
    %v293 = vtanh.pop %v292
    %295 = vrot.lane.b32.xlu0 %v293, 64
    %v296 = vpop.permute.xlu0 %295
    %v298 = vmul.f32 %v278, %v296
    %v299 = vpack.c.bf16 %v298, %v298
    %v301 = vrot.slane %v299, 1
    %302 = vrot.lane.b32.xlu0 %v301, 32
    %v303 = vpop.permute.xlu0 %302
    %v305 = vsel %vm140, %v303, 0
    %307 = vmatpush.bf16.msra.mxu0 0
    %308 = vmatpush.bf16.msra.mxu0 0
    %309 = vmatpush.bf16.msra.mxu0 0
    %310 = vmatpush.bf16.msra.mxu0 0
    %311 = vmatpush.bf16.msra.mxu0 0
    %312 = vmatpush.bf16.msra.mxu0 0
    %313 = vmatpush.bf16.msra.mxu0 %v192
    %314 = vmatpush.bf16.msra.mxu0 %v191
    %315 = vmatmul.bf16.gmra.mxu0 %v305
    %v316 = vpop.f32.mrf.mxu0
    %v317 = vadd.f32 %v96, %v316
    %v318 = vpop.f32.mrf.mxu0
    %319 = vdwg.mxu0
    %v320 = vpack.c.bf16 %v257, %v257
    %322 = vrot.lane.b32.xlu0 %v320, 32
    %v323 = vpop.permute.xlu0 %322
    %v325 = vsel %vm140, %v323, 0
    %327 = vmatpush.bf16.msra.mxu0 0
    %328 = vmatpush.bf16.msra.mxu0 0
    %329 = vmatpush.bf16.msra.mxu0 0
    %330 = vmatpush.bf16.msra.mxu0 0
    %331 = vmatpush.bf16.msra.mxu0 0
    %332 = vmatpush.bf16.msra.mxu0 0
    %333 = vmatpush.bf16.msra.mxu0 %v220
    %334 = vmatpush.bf16.msra.mxu0 %v219
    %335 = vmatmul.bf16.gmra.mxu0 %v325
    %v336 = vpop.f32.mrf.mxu0
    %v337 = vadd.f32 0.0, %v336
    %v338 = vpop.f32.mrf.mxu0
    %339 = vdwg.mxu0
    %v340 = vadd.f32 %v317, %v337
    %v341 = vmul.f32 %v340, %v80
    %v342 = vtanh.pop %v341
    %v343 = vmul.f32 %v342, %v80
    %v344 = vadd.f32 %v343, %v81
    %v345 = vmul.f32 %v344, %v251
    %347 = vrot.lane.b32.xlu0 %v344, 64
    %v348 = vpop.permute.xlu0 %347
    %v350 = vmul.f32 %v344, %v348
    %352 = vrot.lane.b32.xlu0 %v350, 32
    %v353 = vpop.permute.xlu0 %352
    %v355 = vadd.f32 %v345, %v353
    %v356 = vtanh.pop %v355
    %358 = vrot.lane.b32.xlu0 %v356, 64
    %v359 = vpop.permute.xlu0 %358
    %v361 = vmul.f32 %v344, %v359
    %362 = vmatpush.bf16.msra.mxu0 0
    %363 = vmatpush.bf16.msra.mxu0 0
    %364 = vmatpush.bf16.msra.mxu0 0
    %365 = vmatpush.bf16.msra.mxu0 0
    %366 = vmatpush.bf16.msra.mxu0 0
    %367 = vmatpush.bf16.msra.mxu0 0
    %368 = vmatpush.bf16.msra.mxu0 %v137
    %369 = vmatpush.bf16.msra.mxu0 %v136
    %370 = vmatmul.bf16.gmra.mxu0 %v305
    %v371 = vpop.f32.mrf.mxu0
    %v372 = vadd.f32 0.0, %v371
    %v373 = vpop.f32.mrf.mxu0
    %374 = vdwg.mxu0
    %v376 = vrot.slane %v372, 4
    %v378 = vadd.f32 %v124, %v376
    %v379 = vmul.f32 %v378, %v80
    %v380 = vtanh.pop %v379
    %v381 = vmul.f32 %v380, %v80
    %v382 = vadd.f32 %v381, %v81
    %v384 = vrot.slane %v292, 6
    %v386 = vmul.f32 %v382, %v384
    %388 = vrot.lane.b32.xlu0 %v382, 64
    %v389 = vpop.permute.xlu0 %388
    %v391 = vmul.f32 %v382, %v389
    %393 = vrot.lane.b32.xlu0 %v391, 32
    %v394 = vpop.permute.xlu0 %393
    %v396 = vadd.f32 %v386, %v394
    %v397 = vtanh.pop %v396
    %399 = vrot.lane.b32.xlu0 %v397, 64
    %v400 = vpop.permute.xlu0 %399
    %v402 = vmul.f32 %v382, %v400
    %v403 = vpack.c.bf16 %v402, %v402
    %v405 = vrot.slane %v403, 2
    %406 = vrot.lane.b32.xlu0 %v405, 32
    %v407 = vpop.permute.xlu0 %406
    %v409 = vsel %vm140, %v407, 0
    %411 = vmatpush.bf16.msra.mxu0 0
    %412 = vmatpush.bf16.msra.mxu0 0
    %413 = vmatpush.bf16.msra.mxu0 0
    %414 = vmatpush.bf16.msra.mxu0 0
    %415 = vmatpush.bf16.msra.mxu0 0
    %416 = vmatpush.bf16.msra.mxu0 0
    %417 = vmatpush.bf16.msra.mxu0 %v192
    %418 = vmatpush.bf16.msra.mxu0 %v191
    %419 = vmatmul.bf16.gmra.mxu0 %v409
    %v420 = vpop.f32.mrf.mxu0
    %v421 = vadd.f32 %v96, %v420
    %v422 = vpop.f32.mrf.mxu0
    %423 = vdwg.mxu0
    %v424 = vpack.c.bf16 %v361, %v361
    %426 = vrot.lane.b32.xlu0 %v424, 32
    %v427 = vpop.permute.xlu0 %426
    %v429 = vsel %vm140, %v427, 0
    %431 = vmatpush.bf16.msra.mxu0 0
    %432 = vmatpush.bf16.msra.mxu0 0
    %433 = vmatpush.bf16.msra.mxu0 0
    %434 = vmatpush.bf16.msra.mxu0 0
    %435 = vmatpush.bf16.msra.mxu0 0
    %436 = vmatpush.bf16.msra.mxu0 0
    %437 = vmatpush.bf16.msra.mxu0 %v220
    %438 = vmatpush.bf16.msra.mxu0 %v219
    %439 = vmatmul.bf16.gmra.mxu0 %v429
    %v440 = vpop.f32.mrf.mxu0
    %v441 = vadd.f32 0.0, %v440
    %v442 = vpop.f32.mrf.mxu0
    %443 = vdwg.mxu0
    %v444 = vadd.f32 %v421, %v441
    %v445 = vmul.f32 %v444, %v80
    %v446 = vtanh.pop %v445
    %v447 = vmul.f32 %v446, %v80
    %v448 = vadd.f32 %v447, %v81
    %v449 = vmul.f32 %v448, %v355
    %451 = vrot.lane.b32.xlu0 %v448, 64
    %v452 = vpop.permute.xlu0 %451
    %v454 = vmul.f32 %v448, %v452
    %456 = vrot.lane.b32.xlu0 %v454, 32
    %v457 = vpop.permute.xlu0 %456
    %v459 = vadd.f32 %v449, %v457
    %v460 = vtanh.pop %v459
    %462 = vrot.lane.b32.xlu0 %v460, 64
    %v463 = vpop.permute.xlu0 %462
    %v465 = vmul.f32 %v448, %v463
    %466 = vmatpush.bf16.msra.mxu0 0
    %467 = vmatpush.bf16.msra.mxu0 0
    %468 = vmatpush.bf16.msra.mxu0 0
    %469 = vmatpush.bf16.msra.mxu0 0
    %470 = vmatpush.bf16.msra.mxu0 0
    %471 = vmatpush.bf16.msra.mxu0 0
    %472 = vmatpush.bf16.msra.mxu0 %v137
    %473 = vmatpush.bf16.msra.mxu0 %v136
    %474 = vmatmul.bf16.gmra.mxu0 %v409
    %v475 = vpop.f32.mrf.mxu0
    %v476 = vadd.f32 0.0, %v475
    %v477 = vpop.f32.mrf.mxu0
    %478 = vdwg.mxu0
    %v480 = vrot.slane %v476, 2
    %v482 = vadd.f32 %v124, %v480
    %v483 = vmul.f32 %v482, %v80
    %v484 = vtanh.pop %v483
    %v485 = vmul.f32 %v484, %v80
    %v486 = vadd.f32 %v485, %v81
    %v488 = vrot.slane %v396, 6
    %v490 = vmul.f32 %v486, %v488
    %492 = vrot.lane.b32.xlu0 %v486, 64
    %v493 = vpop.permute.xlu0 %492
    %v495 = vmul.f32 %v486, %v493
    %497 = vrot.lane.b32.xlu0 %v495, 32
    %v498 = vpop.permute.xlu0 %497
    %v500 = vadd.f32 %v490, %v498
    %v501 = vtanh.pop %v500
    %503 = vrot.lane.b32.xlu0 %v501, 64
    %v504 = vpop.permute.xlu0 %503
    %v506 = vmul.f32 %v486, %v504
    %v507 = vpack.c.bf16 %v506, %v506
    %v509 = vrot.slane %v507, 3
    %510 = vrot.lane.b32.xlu0 %v509, 32
    %v511 = vpop.permute.xlu0 %510
    %v513 = vsel %vm140, %v511, 0
    %515 = vmatpush.bf16.msra.mxu0 0
    %516 = vmatpush.bf16.msra.mxu0 0
    %517 = vmatpush.bf16.msra.mxu0 0
    %518 = vmatpush.bf16.msra.mxu0 0
    %519 = vmatpush.bf16.msra.mxu0 0
    %520 = vmatpush.bf16.msra.mxu0 0
    %521 = vmatpush.bf16.msra.mxu0 %v192
    %522 = vmatpush.bf16.msra.mxu0 %v191
    %523 = vmatmul.bf16.gmra.mxu0 %v513
    %v524 = vpop.f32.mrf.mxu0
    %v525 = vadd.f32 %v96, %v524
    %v526 = vpop.f32.mrf.mxu0
    %527 = vdwg.mxu0
    %v528 = vpack.c.bf16 %v465, %v465
    %530 = vrot.lane.b32.xlu0 %v528, 32
    %v531 = vpop.permute.xlu0 %530
    %v533 = vsel %vm140, %v531, 0
    %535 = vmatpush.bf16.msra.mxu0 0
    %536 = vmatpush.bf16.msra.mxu0 0
    %537 = vmatpush.bf16.msra.mxu0 0
    %538 = vmatpush.bf16.msra.mxu0 0
    %539 = vmatpush.bf16.msra.mxu0 0
    %540 = vmatpush.bf16.msra.mxu0 0
    %541 = vmatpush.bf16.msra.mxu0 %v220
    %542 = vmatpush.bf16.msra.mxu0 %v219
    %543 = vmatmul.bf16.gmra.mxu0 %v533
    %v544 = vpop.f32.mrf.mxu0
    %v545 = vadd.f32 0.0, %v544
    %v546 = vpop.f32.mrf.mxu0
    %547 = vdwg.mxu0
    %v548 = vadd.f32 %v525, %v545
    %v549 = vmul.f32 %v548, %v80
    %v550 = vtanh.pop %v549
    %v551 = vmul.f32 %v550, %v80
    %v552 = vadd.f32 %v551, %v81
    %v553 = vmul.f32 %v552, %v459
    %555 = vrot.lane.b32.xlu0 %v552, 64
    %v556 = vpop.permute.xlu0 %555
    %v558 = vmul.f32 %v552, %v556
    %560 = vrot.lane.b32.xlu0 %v558, 32
    %v561 = vpop.permute.xlu0 %560
    %v563 = vadd.f32 %v553, %v561
    %v564 = vtanh.pop %v563
    %566 = vrot.lane.b32.xlu0 %v564, 64
    %v567 = vpop.permute.xlu0 %566
    %v569 = vmul.f32 %v552, %v567
    %570 = vmatpush.bf16.msra.mxu0 0
    %571 = vmatpush.bf16.msra.mxu0 0
    %572 = vmatpush.bf16.msra.mxu0 0
    %573 = vmatpush.bf16.msra.mxu0 0
    %574 = vmatpush.bf16.msra.mxu0 0
    %575 = vmatpush.bf16.msra.mxu0 0
    %576 = vmatpush.bf16.msra.mxu0 %v137
    %577 = vmatpush.bf16.msra.mxu0 %v136
    %578 = vmatmul.bf16.gmra.mxu0 %v513
    %v579 = vpop.f32.mrf.mxu0
    %v580 = vadd.f32 0.0, %v579
    %v581 = vpop.f32.mrf.mxu0
    %582 = vdwg.mxu0
    %v583 = vadd.f32 %v126, %v580
    %v584 = vmul.f32 %v583, %v80
    %v585 = vtanh.pop %v584
    %v586 = vmul.f32 %v585, %v80
    %v587 = vadd.f32 %v586, %v81
    %v589 = vrot.slane %v500, 6
    %v591 = vmul.f32 %v587, %v589
    %593 = vrot.lane.b32.xlu0 %v587, 64
    %v594 = vpop.permute.xlu0 %593
    %v596 = vmul.f32 %v587, %v594
    %598 = vrot.lane.b32.xlu0 %v596, 32
    %v599 = vpop.permute.xlu0 %598
    %v601 = vadd.f32 %v591, %v599
    %v602 = vtanh.pop %v601
    %604 = vrot.lane.b32.xlu0 %v602, 64
    %v605 = vpop.permute.xlu0 %604
    %v607 = vmul.f32 %v587, %v605
    %v608 = vpack.c.bf16 %v607, %v607
    %610 = vrot.lane.b32.xlu0 %v608, 32
    %v611 = vpop.permute.xlu0 %610
    %v613 = vsel %vm140, %v611, 0
    %615 = vmatpush.bf16.msra.mxu0 0
    %616 = vmatpush.bf16.msra.mxu0 0
    %617 = vmatpush.bf16.msra.mxu0 0
    %618 = vmatpush.bf16.msra.mxu0 0
    %619 = vmatpush.bf16.msra.mxu0 0
    %620 = vmatpush.bf16.msra.mxu0 0
    %621 = vmatpush.bf16.msra.mxu0 %v192
    %622 = vmatpush.bf16.msra.mxu0 %v191
    %623 = vmatmul.bf16.gmra.mxu0 %v613
    %v624 = vpop.f32.mrf.mxu0
    %v625 = vadd.f32 %v96, %v624
    %v626 = vpop.f32.mrf.mxu0
    %627 = vdwg.mxu0
    %v628 = vpack.c.bf16 %v569, %v569
    %630 = vrot.lane.b32.xlu0 %v628, 32
    %v631 = vpop.permute.xlu0 %630
    %v633 = vsel %vm140, %v631, 0
    %635 = vmatpush.bf16.msra.mxu0 0
    %636 = vmatpush.bf16.msra.mxu0 0
    %637 = vmatpush.bf16.msra.mxu0 0
    %638 = vmatpush.bf16.msra.mxu0 0
    %639 = vmatpush.bf16.msra.mxu0 0
    %640 = vmatpush.bf16.msra.mxu0 0
    %641 = vmatpush.bf16.msra.mxu0 %v220
    %642 = vmatpush.bf16.msra.mxu0 %v219
    %643 = vmatmul.bf16.gmra.mxu0 %v633
    %v644 = vpop.f32.mrf.mxu0
    %v645 = vadd.f32 0.0, %v644
    %v646 = vpop.f32.mrf.mxu0
    %647 = vdwg.mxu0
    %v648 = vadd.f32 %v625, %v645
    %v649 = vmul.f32 %v648, %v80
    %v650 = vtanh.pop %v649
    %v651 = vmul.f32 %v650, %v80
    %v652 = vadd.f32 %v651, %v81
    %v653 = vmul.f32 %v652, %v563
    %655 = vrot.lane.b32.xlu0 %v652, 64
    %v656 = vpop.permute.xlu0 %655
    %v658 = vmul.f32 %v652, %v656
    %660 = vrot.lane.b32.xlu0 %v658, 32
    %v661 = vpop.permute.xlu0 %660
    %v663 = vadd.f32 %v653, %v661
    %v664 = vtanh.pop %v663
    %666 = vrot.lane.b32.xlu0 %v664, 64
    %v667 = vpop.permute.xlu0 %666
    %v669 = vmul.f32 %v652, %v667
    %670 = vmatpush.bf16.msra.mxu0 0
    %671 = vmatpush.bf16.msra.mxu0 0
    %672 = vmatpush.bf16.msra.mxu0 0
    %673 = vmatpush.bf16.msra.mxu0 0
    %674 = vmatpush.bf16.msra.mxu0 0
    %675 = vmatpush.bf16.msra.mxu0 0
    %676 = vmatpush.bf16.msra.mxu0 %v137
    %677 = vmatpush.bf16.msra.mxu0 %v136
    %678 = vmatmul.bf16.gmra.mxu0 %v613
    %v679 = vpop.f32.mrf.mxu0
    %v680 = vadd.f32 0.0, %v679
    %v681 = vpop.f32.mrf.mxu0
    %682 = vdwg.mxu0
    %v684 = vrot.slane %v680, 6
    %v686 = vadd.f32 %v126, %v684
    %v687 = vmul.f32 %v686, %v80
    %v688 = vtanh.pop %v687
    %v689 = vmul.f32 %v688, %v80
    %v690 = vadd.f32 %v689, %v81
    %v692 = vrot.slane %v601, 6
    %v694 = vmul.f32 %v690, %v692
    %696 = vrot.lane.b32.xlu0 %v690, 64
    %v697 = vpop.permute.xlu0 %696
    %v699 = vmul.f32 %v690, %v697
    %701 = vrot.lane.b32.xlu0 %v699, 32
    %v702 = vpop.permute.xlu0 %701
    %v704 = vadd.f32 %v694, %v702
    %v705 = vtanh.pop %v704
    %707 = vrot.lane.b32.xlu0 %v705, 64
    %v708 = vpop.permute.xlu0 %707
    %v710 = vmul.f32 %v690, %v708
    %v711 = vpack.c.bf16 %v710, %v710
    %v713 = vrot.slane %v711, 1
    %714 = vrot.lane.b32.xlu0 %v713, 32
    %v715 = vpop.permute.xlu0 %714
    %v717 = vsel %vm140, %v715, 0
    %719 = vmatpush.bf16.msra.mxu0 0
    %720 = vmatpush.bf16.msra.mxu0 0
    %721 = vmatpush.bf16.msra.mxu0 0
    %722 = vmatpush.bf16.msra.mxu0 0
    %723 = vmatpush.bf16.msra.mxu0 0
    %724 = vmatpush.bf16.msra.mxu0 0
    %725 = vmatpush.bf16.msra.mxu0 %v192
    %726 = vmatpush.bf16.msra.mxu0 %v191
    %727 = vmatmul.bf16.gmra.mxu0 %v717
    %v728 = vpop.f32.mrf.mxu0
    %v729 = vadd.f32 %v96, %v728
    %v730 = vpop.f32.mrf.mxu0
    %731 = vdwg.mxu0
    %v732 = vpack.c.bf16 %v669, %v669
    %734 = vrot.lane.b32.xlu0 %v732, 32
    %v735 = vpop.permute.xlu0 %734
    %v737 = vsel %vm140, %v735, 0
    %739 = vmatpush.bf16.msra.mxu0 0
    %740 = vmatpush.bf16.msra.mxu0 0
    %741 = vmatpush.bf16.msra.mxu0 0
    %742 = vmatpush.bf16.msra.mxu0 0
    %743 = vmatpush.bf16.msra.mxu0 0
    %744 = vmatpush.bf16.msra.mxu0 0
    %745 = vmatpush.bf16.msra.mxu0 %v220
    %746 = vmatpush.bf16.msra.mxu0 %v219
    %747 = vmatmul.bf16.gmra.mxu0 %v737
    %v748 = vpop.f32.mrf.mxu0
    %v749 = vadd.f32 0.0, %v748
    %v750 = vpop.f32.mrf.mxu0
    %751 = vdwg.mxu0
    %v752 = vadd.f32 %v729, %v749
    %v753 = vmul.f32 %v752, %v80
    %v754 = vtanh.pop %v753
    %v755 = vmul.f32 %v754, %v80
    %v756 = vadd.f32 %v755, %v81
    %v757 = vmul.f32 %v756, %v663
    %759 = vrot.lane.b32.xlu0 %v756, 64
    %v760 = vpop.permute.xlu0 %759
    %v762 = vmul.f32 %v756, %v760
    %764 = vrot.lane.b32.xlu0 %v762, 32
    %v765 = vpop.permute.xlu0 %764
    %v767 = vadd.f32 %v757, %v765
    %v768 = vtanh.pop %v767
    %770 = vrot.lane.b32.xlu0 %v768, 64
    %v771 = vpop.permute.xlu0 %770
    %v773 = vmul.f32 %v756, %v771
    %774 = vmatpush.bf16.msra.mxu0 0
    %775 = vmatpush.bf16.msra.mxu0 0
    %776 = vmatpush.bf16.msra.mxu0 0
    %777 = vmatpush.bf16.msra.mxu0 0
    %778 = vmatpush.bf16.msra.mxu0 0
    %779 = vmatpush.bf16.msra.mxu0 0
    %780 = vmatpush.bf16.msra.mxu0 %v137
    %781 = vmatpush.bf16.msra.mxu0 %v136
    %782 = vmatmul.bf16.gmra.mxu0 %v717
    %v783 = vpop.f32.mrf.mxu0
    %v784 = vadd.f32 0.0, %v783
    %v785 = vpop.f32.mrf.mxu0
    %786 = vdwg.mxu0
    %v788 = vrot.slane %v784, 4
    %v790 = vadd.f32 %v126, %v788
    %v791 = vmul.f32 %v790, %v80
    %v792 = vtanh.pop %v791
    %v793 = vmul.f32 %v792, %v80
    %v794 = vadd.f32 %v793, %v81
    %v796 = vrot.slane %v704, 6
    %v798 = vmul.f32 %v794, %v796
    %800 = vrot.lane.b32.xlu0 %v794, 64
    %v801 = vpop.permute.xlu0 %800
    %v803 = vmul.f32 %v794, %v801
    %805 = vrot.lane.b32.xlu0 %v803, 32
    %v806 = vpop.permute.xlu0 %805
    %v808 = vadd.f32 %v798, %v806
    %v809 = vtanh.pop %v808
    %811 = vrot.lane.b32.xlu0 %v809, 64
    %v812 = vpop.permute.xlu0 %811
    %v814 = vmul.f32 %v794, %v812
    %v815 = vpack.c.bf16 %v814, %v814
    %v817 = vrot.slane %v815, 2
    %818 = vrot.lane.b32.xlu0 %v817, 32
    %v819 = vpop.permute.xlu0 %818
    %v821 = vsel %vm140, %v819, 0
    %823 = vmatpush.bf16.msra.mxu0 0
    %824 = vmatpush.bf16.msra.mxu0 0
    %825 = vmatpush.bf16.msra.mxu0 0
    %826 = vmatpush.bf16.msra.mxu0 0
    %827 = vmatpush.bf16.msra.mxu0 0
    %828 = vmatpush.bf16.msra.mxu0 0
    %829 = vmatpush.bf16.msra.mxu0 %v192
    %830 = vmatpush.bf16.msra.mxu0 %v191
    %831 = vmatmul.bf16.gmra.mxu0 %v821
    %v832 = vpop.f32.mrf.mxu0
    %v833 = vadd.f32 %v96, %v832
    %v834 = vpop.f32.mrf.mxu0
    %835 = vdwg.mxu0
    %v836 = vpack.c.bf16 %v773, %v773
    %838 = vrot.lane.b32.xlu0 %v836, 32
    %v839 = vpop.permute.xlu0 %838
    %v841 = vsel %vm140, %v839, 0
    %843 = vmatpush.bf16.msra.mxu0 0
    %844 = vmatpush.bf16.msra.mxu0 0
    %845 = vmatpush.bf16.msra.mxu0 0
    %846 = vmatpush.bf16.msra.mxu0 0
    %847 = vmatpush.bf16.msra.mxu0 0
    %848 = vmatpush.bf16.msra.mxu0 0
    %849 = vmatpush.bf16.msra.mxu0 %v220
    %850 = vmatpush.bf16.msra.mxu0 %v219
    %851 = vmatmul.bf16.gmra.mxu0 %v841
    %v852 = vpop.f32.mrf.mxu0
    %v853 = vadd.f32 0.0, %v852
    %v854 = vpop.f32.mrf.mxu0
    %855 = vdwg.mxu0
    %v856 = vadd.f32 %v833, %v853
    %v857 = vmul.f32 %v856, %v80
    %v858 = vtanh.pop %v857
    %v859 = vmul.f32 %v858, %v80
    %v860 = vadd.f32 %v859, %v81
    %v861 = vmul.f32 %v860, %v767
    %863 = vrot.lane.b32.xlu0 %v860, 64
    %v864 = vpop.permute.xlu0 %863
    %v866 = vmul.f32 %v860, %v864
    %868 = vrot.lane.b32.xlu0 %v866, 32
    %v869 = vpop.permute.xlu0 %868
    %v871 = vadd.f32 %v861, %v869
    %v872 = vtanh.pop %v871
    %874 = vrot.lane.b32.xlu0 %v872, 64
    %v875 = vpop.permute.xlu0 %874
    %v877 = vmul.f32 %v860, %v875
    %878 = vmatpush.bf16.msra.mxu0 0
    %879 = vmatpush.bf16.msra.mxu0 0
    %880 = vmatpush.bf16.msra.mxu0 0
    %881 = vmatpush.bf16.msra.mxu0 0
    %882 = vmatpush.bf16.msra.mxu0 0
    %883 = vmatpush.bf16.msra.mxu0 0
    %884 = vmatpush.bf16.msra.mxu0 %v137
    %885 = vmatpush.bf16.msra.mxu0 %v136
    %886 = vmatmul.bf16.gmra.mxu0 %v821
    %v887 = vpop.f32.mrf.mxu0
    %v888 = vadd.f32 0.0, %v887
    %v889 = vpop.f32.mrf.mxu0
    %890 = vdwg.mxu0
    %v892 = vrot.slane %v888, 2
    %v894 = vadd.f32 %v126, %v892
    %v895 = vmul.f32 %v894, %v80
    %v896 = vtanh.pop %v895
    %v897 = vmul.f32 %v896, %v80
    %v898 = vadd.f32 %v897, %v81
    %v900 = vrot.slane %v808, 6
    %v902 = vmul.f32 %v898, %v900
    %904 = vrot.lane.b32.xlu0 %v898, 64
    %v905 = vpop.permute.xlu0 %904
    %v907 = vmul.f32 %v898, %v905
    %909 = vrot.lane.b32.xlu0 %v907, 32
    %v910 = vpop.permute.xlu0 %909
    %v912 = vadd.f32 %v902, %v910
    %v913 = vtanh.pop %v912
    %915 = vrot.lane.b32.xlu0 %v913, 64
    %v916 = vpop.permute.xlu0 %915
    %v918 = vmul.f32 %v898, %v916
    %v919 = vpack.c.bf16 %v918, %v918
    %v921 = vrot.slane %v919, 3
    %922 = vrot.lane.b32.xlu0 %v921, 32
    %v923 = vpop.permute.xlu0 %922
    %v925 = vsel %vm140, %v923, 0
    %927 = vmatpush.bf16.msra.mxu0 0
    %928 = vmatpush.bf16.msra.mxu0 0
    %929 = vmatpush.bf16.msra.mxu0 0
    %930 = vmatpush.bf16.msra.mxu0 0
    %931 = vmatpush.bf16.msra.mxu0 0
    %932 = vmatpush.bf16.msra.mxu0 0
    %933 = vmatpush.bf16.msra.mxu0 %v192
    %934 = vmatpush.bf16.msra.mxu0 %v191
    %935 = vmatmul.bf16.gmra.mxu0 %v925
    %v936 = vpop.f32.mrf.mxu0
    %v937 = vadd.f32 %v96, %v936
    %v938 = vpop.f32.mrf.mxu0
    %939 = vdwg.mxu0
    %v940 = vpack.c.bf16 %v877, %v877
    %942 = vrot.lane.b32.xlu0 %v940, 32
    %v943 = vpop.permute.xlu0 %942
    %v945 = vsel %vm140, %v943, 0
    %947 = vmatpush.bf16.msra.mxu0 0
    %948 = vmatpush.bf16.msra.mxu0 0
    %949 = vmatpush.bf16.msra.mxu0 0
    %950 = vmatpush.bf16.msra.mxu0 0
    %951 = vmatpush.bf16.msra.mxu0 0
    %952 = vmatpush.bf16.msra.mxu0 0
    %953 = vmatpush.bf16.msra.mxu0 %v220
    %954 = vmatpush.bf16.msra.mxu0 %v219
    %955 = vmatmul.bf16.gmra.mxu0 %v945
    %v956 = vpop.f32.mrf.mxu0
    %v957 = vadd.f32 0.0, %v956
    %v958 = vpop.f32.mrf.mxu0
    %959 = vdwg.mxu0
    %v960 = vadd.f32 %v937, %v957
    %v961 = vmul.f32 %v960, %v80
    %v962 = vtanh.pop %v961
    %v963 = vmul.f32 %v962, %v80
    %v964 = vadd.f32 %v963, %v81
    %v965 = vmul.f32 %v964, %v871
    %967 = vrot.lane.b32.xlu0 %v964, 64
    %v968 = vpop.permute.xlu0 %967
    %v970 = vmul.f32 %v964, %v968
    %972 = vrot.lane.b32.xlu0 %v970, 32
    %v973 = vpop.permute.xlu0 %972
    %v975 = vadd.f32 %v965, %v973
    %v976 = vtanh.pop %v975
    %978 = vrot.lane.b32.xlu0 %v976, 64
    %v979 = vpop.permute.xlu0 %978
    %v981 = vmul.f32 %v964, %v979
    %v982 = vpack.c.bf16 %v981, %v981
    %v983 = vld [vmem:[%s7] sm:$0xf]
    %v984 = vld [vmem:[%s7 + $0x4] sm:$0xf]
    %v985 = vld [vmem:[%s7 + $0x8] sm:$0xf]
    %v986 = vld [vmem:[%s7 + $0xc] sm:$0xf]
    %v987 = vld [vmem:[#allocation7] sm:$0x1]
    %v989 = vperm.slane %v987, 0
    %992 = vrot.lane.b32.xlu0 %v982, 32
    %v993 = vpop.permute.xlu0 %992
    %v998 = vunpack.c.l.b16 %v983
    %v999 = vunpack.c.l.b16 %v984
    %v1000 = vunpack.c.l.b16 %v985
    %v1001 = vunpack.c.l.b16 %v986
    %v1002 = vpack.c.b16 %v999, %v998
    %v1003 = vpack.c.b16 %v1001, %v1000
    %v1007 = vsel %vm140, %v993, 0
    %1009 = vmatpush.bf16.msra.mxu0 0
    %1010 = vmatpush.bf16.msra.mxu0 0
    %1011 = vmatpush.bf16.msra.mxu0 0
    %1012 = vmatpush.bf16.msra.mxu0 0
    %1013 = vmatpush.bf16.msra.mxu0 0
    %1014 = vmatpush.bf16.msra.mxu0 0
    %1015 = vmatpush.bf16.msra.mxu0 %v1003
    %1016 = vmatpush.bf16.msra.mxu0 %v1002
    %1017 = vmatmul.bf16.gmra.mxu0 %v1007
    %v1018 = vpop.f32.mrf.mxu0
    %v1019 = vadd.f32 %v989, %v1018
    %v1020 = vpop.f32.mrf.mxu0
    %1021 = vdwg.mxu0
    %vm1022 = vcmask 9216
    %1023 = vst.msk [vmem:[#allocation8] sm:$0x3] %vm1022, %v1019
    // Predicated region
    $region50: #{lstm_model_forward.1} parent=1 // pred_check
      _
    $region51: #{lstm_model_forward.1} parent=1 // pred_check_branch
      %1025 = sbr.rel (0) target = $region53
    $region52: #{lstm_model_forward.1} parent=1 // pred_region
      %1027 = vsyncadd [#allocation4], 0
      %s1029 = sshll.u32 [#allocation8], 4
      %s1030 = int_to_ptr.vmem [resolvable:$true] %s1029
      %s1031 = sshll.u32 %s9, 4
      %s1032 = int_to_ptr.hbm [resolvable:$true] %s1031
      %1034 = dma.vmem_to_hbm [thread:$0]  %s1030, 32, %s1032, [#allocation4]
    $region53: #{lstm_model_forward.1} parent=1 // pred_fallthru
      _
    // Predicated region
    $region54: #{lstm_model_forward.1} parent=1 // pred_check
      _
    $region55: #{lstm_model_forward.1} parent=1 // pred_check_branch
      %1036 = sbr.rel (0) target = $region57
    $region56: #{lstm_model_forward.1} parent=1 // pred_region
      %1038 = dma.done [#allocation4], 32
    $region57: #{lstm_model_forward.1} parent=1 // pred_fallthru
      _
    %1039 = vsyncpa [#allocation3], 1
    %1040 = vsyncpa [#allocation6], 1
    %1041 = vsyncpa [#allocation4], 1

</llo_original>
